<compile_context>
chip_gen: v7x
topology: tpu7x:2x2x1
jax: 0.10.0
libtpu: 0.0.40
codegen_flags: <defaults>
</compile_context>

<pallas_src>
import jax
import jax.numpy as jnp
import numpy as np
from jax.experimental import pallas as pl
from jax.experimental.pallas import tpu as pltpu

# ---------------------------------------------------------------------------
# Scaled-down hyper-parameters (same relationships as the original constants):
#   MAX_DOC_TERMS=200 -> D=16, MAX_QUERY_TERMS=20 -> Q=8,
#   NUM_HIDDEN_NODES=300 -> H=32, POOLING_KERNEL_WIDTH_DOC=100 -> PKW_DOC=8,
#   TERM_WINDOW_SIZE=3 (unchanged).
# ---------------------------------------------------------------------------
B = 2
D = 16                                   # MAX_DOC_TERMS
Q = 8                                    # MAX_QUERY_TERMS
H = 32                                   # NUM_HIDDEN_NODES
TERM_WINDOW = 3                          # TERM_WINDOW_SIZE
PKW_DOC = 8                              # POOLING_KERNEL_WIDTH_DOC
PKW_QUERY = Q - TERM_WINDOW + 1          # POOLING_KERNEL_WIDTH_QUERY = 6
P = D - TERM_WINDOW + 1 - PKW_DOC + 1    # NUM_POOLING_WINDOWS_DOC = 7
VOCAB = 64
SCALE = 0.1

LQ, LD = Q - TERM_WINDOW + 1, D - TERM_WINDOW + 1   # conv output lengths: 6, 14
RS = 8                        # padded row stride per position (8-sublane aligned)
QD = Q * D                    # 128
NW = Q * H                    # 256 wide width (P*H=224 live + 32 zero pad)
K1 = QD + 8                   # 136: local input width (128 data, col 128 = ones)
K2 = 3 * H + 8                # 104: im2col width (96 data, col 96 = ones)
NC = 2 * H + 8                # 72 : fused-conv out width (q | d | ones | pad)
RQ, RD = LQ * RS, LD * RS     # 48, 112
RQD = RQ + RD                 # 160
RP = P * RS                   # 56

# wide slab (width 256) row offsets — multiples of 16 (bf16 sublane tiling)
OFF_LOC1, OFF_QLIN, OFF_DC1, OFF_MASK = 0, 144, 224, 304
W_WIDE_ROWS = 360
# narrow slab (width 72) row offsets
OFF_LOC2, OFF_FLATD, OFF_CONV, OFF_SDIST = 0, 256, 512, 624
OFF_L2, OFF_D2, OFF_C1, OFF_C2, OFF_C3 = 640, 672, 704, 736, 768
W_NAR_ROWS = 800
# bias block rows
B_L1, B_L2, B_D1, B_D2, B_C1, B_C2, B_C3 = range(7)


def _tree_max(parts):
    """Balanced pairwise max of a static list of (aligned) tiles."""
    parts = list(parts)
    while len(parts) > 1:
        nxt = [jnp.maximum(parts[i], parts[i + 1]) for i in range(0, len(parts) - 1, 2)]
        if len(parts) % 2:
            nxt.append(parts[-1])
        parts = nxt
    return parts[0]


# ---------------------------------------------------------------------------
# Pallas kernel: whole batch, whole Duet forward, single invocation (no grid)
# ---------------------------------------------------------------------------
def _duet_kernel(xl_ref, xqd_ref, wide_ref, nar_ref, b_ref, y_ref):
    f32, bf = jnp.float32, jnp.bfloat16
    relu = lambda v: jnp.maximum(v, 0.0)
    dot = lambda a, w: jnp.dot(a, w, preferred_element_type=f32)   # bf16 in, f32 acc
    bias = lambda i: b_ref[i:i + 1, :]                             # (1, H) f32

    # ----- static, 16-row-aligned slices of the two packed bf16 weight slabs -----
    w_loc1 = wide_ref[OFF_LOC1:OFF_LOC1 + K1, :]                  # (136, 256)
    w_qlin = wide_ref[OFF_QLIN:OFF_QLIN + NC, :]                  # (72, 256)
    w_dc1 = wide_ref[OFF_DC1:OFF_DC1 + NC, :]                     # (72, 256)
    mask_d = wide_ref[OFF_MASK:OFF_MASK + RP, :].astype(f32)      # (56, 256)

    w_loc2 = nar_ref[OFF_LOC2:OFF_LOC2 + NW, 0:H]                 # (256, 32)
    w_flatd = nar_ref[OFF_FLATD:OFF_FLATD + NW, 0:H]              # (256, 32)
    w_conv = nar_ref[OFF_CONV:OFF_CONV + K2, :]                   # (104, 72)
    s_dist = nar_ref[OFF_SDIST:OFF_SDIST + B, 0:RP]               # (2, 56) 0/1 sum
    w_l2 = nar_ref[OFF_L2:OFF_L2 + H, 0:H]
    w_d2 = nar_ref[OFF_D2:OFF_D2 + H, 0:H]
    w_c1 = nar_ref[OFF_C1:OFF_C1 + H, 0:H]
    w_c2 = nar_ref[OFF_C2:OFF_C2 + H, 0:H]
    w_c3 = nar_ref[OFF_C3:OFF_C3 + H, 0:H]

    # ----- local path: Conv1d(k=1) -> ReLU -> Flatten -> Linear -> ReLU -> Linear
    # Block-diagonal conv weight keeps rows = batch; conv bias + Flatten-Linear bias
    # folded via the ones column of xl (col 128).
    c_loc = relu(dot(xl_ref[...], w_loc1))                        # (2, 256)
    h1 = relu(dot(c_loc.astype(bf), w_loc2) + bias(B_L1))         # (2, 32)
    h_local = relu(dot(h1.astype(bf), w_l2) + bias(B_L2))         # (2, 32)

    # ----- fused k=3 convs: query rows 0:48, doc rows 48:160 (biases folded) -----
    cqd = relu(dot(xqd_ref[...], w_conv))                         # (160, 72), col 64 = 1

    # query: MaxPool over all LQ positions — 8-aligned row blocks -> plain vreg max
    cq = cqd[0:RQ, :]
    pq = _tree_max([cq[l * RS:(l + 1) * RS, :] for l in range(LQ)])     # (8, 72)
    hq = relu(dot(pq.astype(bf), w_qlin))                         # (8, 256) col-tiled P
    hq_rep = jnp.concatenate([hq] * P, axis=0)                    # (56, 256) aligned bcast

    # doc: MaxPool(PKW_DOC, stride=1) — every window slice starts on a multiple of 8
    cd = cqd[RQ:RQD, :]
    pooled = _tree_max([cd[w * RS:w * RS + RP, :] for w in range(PKW_DOC)])  # (56, 72)
    hd_rep = relu(dot(pooled.astype(bf), w_dc1))                  # (56, 256) col-tiled P

    # ----- distributed combination: Hadamard -> Flatten -> Linear x2 -----
    # Precomputed block-diagonal mask selects row-block p == col-block p and kills
    # padded rows; the Flatten->Linear is one matmul; the sum over P row blocks is
    # one matmul against the constant 0/1 matrix s_dist.
    s = ((hd_rep * hq_rep) * mask_d).astype(bf)                   # (56, 256)
    t_dist = dot(s, w_flatd)                                      # (56, 32)
    hd1 = relu(dot(s_dist, t_dist.astype(bf)) + bias(B_D1))       # (2, 32)
    h_dist = relu(dot(hd1.astype(bf), w_d2) + bias(B_D2))         # (2, 32)

    # ----- combination head (Dropout = identity at inference) -----
    hc = (h_local + h_dist).astype(bf)
    hc = relu(dot(hc, w_c1) + bias(B_C1)).astype(bf)
    hc = relu(dot(hc, w_c2) + bias(B_C2)).astype(bf)
    y = relu(dot(hc, w_c3) + bias(B_C3)) * SCALE                  # (2, 32); col 0 real
    y_ref[...] = y[:, 0:1]                                        # (2, 1)


# ---------------------------------------------------------------------------
# Parameter init (PyTorch layouts), deterministic.
# ---------------------------------------------------------------------------
def init_pt_params(key):
    ks = list(jax.random.split(key, 26))
    nxt = iter(ks)
    w = lambda shape: jax.random.normal(next(nxt), shape, dtype=jnp.float32) * 0.2
    bias = lambda shape: jnp.abs(jax.random.normal(next(nxt), shape, dtype=jnp.float32)) * 0.05 + 0.02
    p = {}
    p['embed'] = w((VOCAB, H))                                          # nn.Embedding(VOCAB, H)
    p['local_conv_w'] = w((H, D, 1)); p['local_conv_b'] = bias((H,))    # Conv1d(D, H, 1)
    p['local_l1_w'] = w((H, H * Q)); p['local_l1_b'] = bias((H,))       # Linear(H*Q, H)
    p['local_l2_w'] = w((H, H));     p['local_l2_b'] = bias((H,))
    p['q_conv_w'] = w((H, H, 3));    p['q_conv_b'] = bias((H,))         # Conv1d(H, H, 3)
    p['q_lin_w'] = w((H, H));        p['q_lin_b'] = bias((H,))
    p['d_conv3_w'] = w((H, H, 3));   p['d_conv3_b'] = bias((H,))
    p['d_conv1_w'] = w((H, H, 1));   p['d_conv1_b'] = bias((H,))
    p['dist_l1_w'] = w((H, H * P));  p['dist_l1_b'] = bias((H,))        # Linear(H*P, H)
    p['dist_l2_w'] = w((H, H));      p['dist_l2_b'] = bias((H,))
    p['comb1_w'] = w((H, H));        p['comb1_b'] = bias((H,))
    p['comb2_w'] = w((H, H));        p['comb2_b'] = bias((H,))
    p['comb3_w'] = w((1, H));        p['comb3_b'] = bias((1,))
    return p


def _bf16_roundtrip(tree):
    return jax.tree_util.tree_map(
        lambda a: a.astype(jnp.bfloat16).astype(jnp.float32)
        if jnp.issubdtype(a.dtype, jnp.floating) else a, tree)


# ---------------------------------------------------------------------------
# Weight repacking (offline): two bf16 slabs + one small f32 bias block.
# ---------------------------------------------------------------------------
def pack_weights(p):
    f32, bf = jnp.float32, jnp.bfloat16

    # ---------------- wide slab: (360, 256) ----------------
    wide = jnp.zeros((W_WIDE_ROWS, NW), f32)
    # local k=1 conv as a block-diagonal (Q*D, Q*H) map + folded (tiled) bias row
    w_lc = p['local_conv_w'][:, :, 0]                                    # (H, D)
    wide = wide.at[OFF_LOC1:OFF_LOC1 + QD, :].set(jnp.kron(jnp.eye(Q, dtype=f32), w_lc.T))
    wide = wide.at[OFF_LOC1 + QD, :].set(jnp.tile(p['local_conv_b'], Q))
    # query Linear(H, H), column-tiled P times + folded bias row (ones lives at col 2H)
    wide = wide.at[OFF_QLIN:OFF_QLIN + H, :P * H].set(jnp.tile(p['q_lin_w'].T, (1, P)))
    wide = wide.at[OFF_QLIN + 2 * H, :P * H].set(jnp.tile(p['q_lin_b'], P))
    # doc k=1 conv, column-tiled P times (doc channels live in cols H:2H of cqd)
    wide = wide.at[OFF_DC1 + H:OFF_DC1 + 2 * H, :P * H].set(
        jnp.tile(p['d_conv1_w'][:, :, 0].T, (1, P)))
    wide = wide.at[OFF_DC1 + 2 * H, :P * H].set(jnp.tile(p['d_conv1_b'], P))
    # block-diagonal 0/1 Hadamard mask (also zeroes padded rows b >= B)
    r, c = np.arange(RP), np.arange(NW)
    mask = ((r[:, None] // RS) == (c[None, :] // H)) & ((r[:, None] % RS) < B)
    wide = wide.at[OFF_MASK:OFF_MASK + RP, :].set(jnp.asarray(mask, f32))

    # ---------------- narrow slab: (800, 72) ----------------
    nar = jnp.zeros((W_NAR_ROWS, NC), f32)
    # local Flatten->Linear(H*Q, H): slab row (q*H + o) <-> PyTorch column (o*Q + q)
    nar = nar.at[OFF_LOC2:OFF_LOC2 + NW, :H].set(
        p['local_l1_w'].reshape(H, H, Q).transpose(2, 1, 0).reshape(NW, H))
    # dist Flatten->Linear(H*P, H): slab row (p*H + o) <-> PyTorch column (o*P + p)
    nar = nar.at[OFF_FLATD:OFF_FLATD + P * H, :H].set(
        p['dist_l1_w'].reshape(H, H, P).transpose(2, 1, 0).reshape(P * H, H))
    # fused k=3 convs: query -> cols 0:H, doc -> cols H:2H; bias row + ones passthrough
    nar = nar.at[OFF_CONV:OFF_CONV + 3 * H, 0:H].set(
        p['q_conv_w'].transpose(2, 1, 0).reshape(3 * H, H))
    nar = nar.at[OFF_CONV:OFF_CONV + 3 * H, H:2 * H].set(
        p['d_conv3_w'].transpose(2, 1, 0).reshape(3 * H, H))
    nar = nar.at[OFF_CONV + 3 * H, 0:H].set(p['q_conv_b'])
    nar = nar.at[OFF_CONV + 3 * H, H:2 * H].set(p['d_conv3_b'])
    nar = nar.at[OFF_CONV + 3 * H, 2 * H].set(1.0)
    # 0/1 row-block summation matrix (replaces the serial tree-sum over P blocks)
    s_sum = np.zeros((B, RP), np.float32)
    for b in range(B):
        s_sum[b, np.arange(P) * RS + b] = 1.0
    nar = nar.at[OFF_SDIST:OFF_SDIST + B, :RP].set(jnp.asarray(s_sum))
    # (H, H) Linears in row layout (x @ W.T); comb3 lives in column 0 only
    nar = nar.at[OFF_L2:OFF_L2 + H, :H].set(p['local_l2_w'].T)
    nar = nar.at[OFF_D2:OFF_D2 + H, :H].set(p['dist_l2_w'].T)
    nar = nar.at[OFF_C1:OFF_C1 + H, :H].set(p['comb1_w'].T)
    nar = nar.at[OFF_C2:OFF_C2 + H, :H].set(p['comb2_w'].T)
    nar = nar.at[OFF_C3:OFF_C3 + H, 0:1].set(p['comb3_w'].T)

    b_small = jnp.zeros((8, H), f32)
    b_small = b_small.at[B_L1].set(p['local_l1_b'])
    b_small = b_small.at[B_L2].set(p['local_l2_b'])
    b_small = b_small.at[B_D1].set(p['dist_l1_b'])
    b_small = b_small.at[B_D2].set(p['dist_l2_b'])
    b_small = b_small.at[B_C1].set(p['comb1_b'])
    b_small = b_small.at[B_C2].set(p['comb2_b'])
    b_small = b_small.at[B_C3, 0:1].set(p['comb3_b'])

    return {'embed': p['embed'], 'wide': wide.astype(bf), 'narrow': nar.astype(bf),
            'b_small': b_small}


# ---------------------------------------------------------------------------
# Wrapper: embedding gather, masking, im2col + aligned-row layout, single call.
# ---------------------------------------------------------------------------
def _windows3(x):
    """x: (B, L, C) -> (B, L-2, 3C) sliding k=3 windows, col (k*C + i)."""
    L = x.shape[1]
    return jnp.concatenate([x[:, 0:L - 2, :], x[:, 1:L - 1, :], x[:, 2:L, :]], axis=-1)


def _rows8(w):
    """(B, L, 3H) -> (L*8, 3H) with row l*8 + b; rows b >= B are zero padding."""
    L = w.shape[1]
    wt = jnp.transpose(w, (1, 0, 2))
    wt = jnp.pad(wt, ((0, 0), (0, RS - B), (0, 0)))
    return wt.reshape(L * RS, 3 * H)


@jax.jit
def duet_forward_pallas(packed, x_local, x_dist_q, x_dist_d, x_mask_q, x_mask_d):
    f32 = jnp.float32
    # Embedding gather + masking in plain JAX (data-dependent gather stays in XLA).
    eq = jnp.take(packed['embed'], x_dist_q, axis=0) * x_mask_q          # (B, Q, H)
    ed = jnp.take(packed['embed'], x_dist_d, axis=0) * x_mask_d          # (B, D, H)

    # local input: (B, D, Q) -> (B, Q*D) with index q*D+d, + ones col, pad to K1
    xl = jnp.transpose(x_local, (0, 2, 1)).reshape(B, QD)
    xl_aug = jnp.concatenate(
        [xl, jnp.ones((B, 1), f32), jnp.zeros((B, K1 - QD - 1), f32)],
        axis=1).astype(jnp.bfloat16)                                     # (2, 136)

    # im2col windows with padded row stride 8 (rows l*8 + b); query + doc stacked
    xq = _rows8(_windows3(eq))                                           # (48, 96)
    xd = _rows8(_windows3(ed))                                           # (112, 96)
    xqd = jnp.concatenate([xq, xd], axis=0)                              # (160, 96)
    xqd = jnp.concatenate(
        [xqd, jnp.ones((RQD, 1), f32), jnp.zeros((RQD, K2 - 3 * H - 1), f32)],
        axis=1).astype(jnp.bfloat16)                                     # (160, 104)

    vmem = pl.BlockSpec(memory_space=pltpu.MemorySpace.VMEM)             # whole array in VMEM
    return pl.pallas_call(
        _duet_kernel,
        out_shape=jax.ShapeDtypeStruct((B, 1), jnp.float32),
        in_specs=[vmem] * 5,
        out_specs=vmem,
    )(xl_aug, xqd, packed['wide'], packed['narrow'], packed['b_small'])


# ---------------------------------------------------------------------------
# Pure-JAX reference with PyTorch (NCW) semantics, for validation.
# ---------------------------------------------------------------------------
def reference_forward(p, x_local, x_dist_q, x_dist_d, x_mask_q, x_mask_d):
    relu = lambda v: jnp.maximum(v, 0.0)

    def conv1d(x, w, b):  # x: (B, C, L), w: (O, I, K)
        y = jax.lax.conv_general_dilated(
            x, w, window_strides=(1,), padding='VALID',
            dimension_numbers=('NCH', 'OIH', 'NCH'))
        return y + b[None, :, None]

    # local
    c = relu(conv1d(x_local, p['local_conv_w'], p['local_conv_b']))      # (B, H, Q)
    flat = c.reshape(c.shape[0], -1)
    h = relu(flat @ p['local_l1_w'].T + p['local_l1_b'])
    h_local = relu(h @ p['local_l2_w'].T + p['local_l2_b'])
    # dist query
    eq = (p['embed'][x_dist_q] * x_mask_q).transpose(0, 2, 1)            # (B, H, Q)
    cq = relu(conv1d(eq, p['q_conv_w'], p['q_conv_b']))                  # (B, H, Q-2)
    pq = jnp.max(cq, axis=2)                                             # MaxPool1d(PKW_QUERY)
    h_dist_q = relu(pq @ p['q_lin_w'].T + p['q_lin_b'])
    # dist doc
    ed = (p['embed'][x_dist_d] * x_mask_d).transpose(0, 2, 1)            # (B, H, D)
    cd = relu(conv1d(ed, p['d_conv3_w'], p['d_conv3_b']))                # (B, H, D-2)
    pooled = jax.lax.reduce_window(cd, -jnp.inf, jax.lax.max,
                                   (1, 1, PKW_DOC), (1, 1, 1), 'VALID')  # (B, H, P)
    h_dist_d = relu(conv1d(pooled, p['d_conv1_w'], p['d_conv1_b']))      # (B, H, P)
    # dist combination
    prod = h_dist_q[:, :, None] * h_dist_d
    pf = prod.reshape(prod.shape[0], -1)
    hd = relu(pf @ p['dist_l1_w'].T + p['dist_l1_b'])
    h_dist = relu(hd @ p['dist_l2_w'].T + p['dist_l2_b'])
    # combination head
    hc = h_local + h_dist
    hc = relu(hc @ p['comb1_w'].T + p['comb1_b'])
    hc = relu(hc @ p['comb2_w'].T + p['comb2_b'])
    return relu(hc @ p['comb3_w'].T + p['comb3_b']) * SCALE


if __name__ == "__main__":
    key = jax.random.PRNGKey(0)
    kparam, kdata = jax.random.split(key)
    params = init_pt_params(kparam)
    # Round-trip params/data through bf16 so the f32 reference and the bf16-operand
    # kernel share exactly representable values (only activation rounding differs).
    params = _bf16_roundtrip(params)
    packed = pack_weights(params)

    ks = jax.random.split(kdata, 3)
    x_local = jax.random.uniform(ks[0], (B, D, Q), dtype=jnp.float32)       # (B, MAX_DOC_TERMS, MAX_QUERY_TERMS)
    x_local = x_local.astype(jnp.bfloat16).astype(jnp.float32)
    x_dist_q = jax.random.randint(ks[1], (B, Q), 0, VOCAB, dtype=jnp.int32)
    x_dist_d = jax.random.randint(ks[2], (B, D), 0, VOCAB, dtype=jnp.int32)
    len_q = jnp.array([6, Q]); len_d = jnp.array([12, D])
    x_mask_q = (jnp.arange(Q)[None, :] < len_q[:, None]).astype(jnp.float32)[:, :, None]
    x_mask_d = (jnp.arange(D)[None, :] < len_d[:, None]).astype(jnp.float32)[:, :, None]

    y = duet_forward_pallas(packed, x_local, x_dist_q, x_dist_d, x_mask_q, x_mask_d)
    y = jax.block_until_ready(y)

    y_ref = reference_forward(params, x_local, x_dist_q, x_dist_d, x_mask_q, x_mask_d)
    np.testing.assert_allclose(np.asarray(y), np.asarray(y_ref), rtol=5e-2, atol=5e-3)
    print("KERNEL_OK")
</pallas_src>

<mosaic_0001>
module attributes {stable_mosaic.version = 11 : i64} {
  func.func @_duet_kernel(%arg0: memref<2x136xbf16, #tpu.memory_space<vmem>>, %arg1: memref<160x104xbf16, #tpu.memory_space<vmem>>, %arg2: memref<360x256xbf16, #tpu.memory_space<vmem>>, %arg3: memref<800x72xbf16, #tpu.memory_space<vmem>>, %arg4: memref<8x32xf32, #tpu.memory_space<vmem>>, %arg5: memref<2x1xf32, #tpu.memory_space<vmem>>) attributes {dimension_semantics = [], scalar_prefetch = 0 : i64, scratch_operands = 0 : i64, tpu.core_type = #tpu.core_type<tc>} {
    %c0 = arith.constant 0 : index
    %c0_0 = arith.constant 0 : index
    %0 = vector.load %arg2[%c0, %c0_0] : memref<360x256xbf16, #tpu.memory_space<vmem>>, vector<136x256xbf16>
    %c144 = arith.constant 144 : index
    %c0_1 = arith.constant 0 : index
    %1 = vector.load %arg2[%c144, %c0_1] : memref<360x256xbf16, #tpu.memory_space<vmem>>, vector<72x256xbf16>
    %c224 = arith.constant 224 : index
    %c0_2 = arith.constant 0 : index
    %2 = vector.load %arg2[%c224, %c0_2] : memref<360x256xbf16, #tpu.memory_space<vmem>>, vector<72x256xbf16>
    %c304 = arith.constant 304 : index
    %c0_3 = arith.constant 0 : index
    %3 = vector.load %arg2[%c304, %c0_3] : memref<360x256xbf16, #tpu.memory_space<vmem>>, vector<56x256xbf16>
    %4 = arith.extf %3 : vector<56x256xbf16> to vector<56x256xf32>
    %c0_4 = arith.constant 0 : index
    %c0_5 = arith.constant 0 : index
    %5 = vector.load %arg3[%c0_4, %c0_5] : memref<800x72xbf16, #tpu.memory_space<vmem>>, vector<256x32xbf16>
    %c256 = arith.constant 256 : index
    %c0_6 = arith.constant 0 : index
    %6 = vector.load %arg3[%c256, %c0_6] : memref<800x72xbf16, #tpu.memory_space<vmem>>, vector<256x32xbf16>
    %c512 = arith.constant 512 : index
    %c0_7 = arith.constant 0 : index
    %7 = vector.load %arg3[%c512, %c0_7] : memref<800x72xbf16, #tpu.memory_space<vmem>>, vector<104x72xbf16>
    %c624 = arith.constant 624 : index
    %c0_8 = arith.constant 0 : index
    %8 = vector.load %arg3[%c624, %c0_8] : memref<800x72xbf16, #tpu.memory_space<vmem>>, vector<2x56xbf16>
    %c640 = arith.constant 640 : index
    %c0_9 = arith.constant 0 : index
    %9 = vector.load %arg3[%c640, %c0_9] : memref<800x72xbf16, #tpu.memory_space<vmem>>, vector<32x32xbf16>
    %c672 = arith.constant 672 : index
    %c0_10 = arith.constant 0 : index
    %10 = vector.load %arg3[%c672, %c0_10] : memref<800x72xbf16, #tpu.memory_space<vmem>>, vector<32x32xbf16>
    %c704 = arith.constant 704 : index
    %c0_11 = arith.constant 0 : index
    %11 = vector.load %arg3[%c704, %c0_11] : memref<800x72xbf16, #tpu.memory_space<vmem>>, vector<32x32xbf16>
    %c736 = arith.constant 736 : index
    %c0_12 = arith.constant 0 : index
    %12 = vector.load %arg3[%c736, %c0_12] : memref<800x72xbf16, #tpu.memory_space<vmem>>, vector<32x32xbf16>
    %c768 = arith.constant 768 : index
    %c0_13 = arith.constant 0 : index
    %13 = vector.load %arg3[%c768, %c0_13] : memref<800x72xbf16, #tpu.memory_space<vmem>>, vector<32x32xbf16>
    %c0_14 = arith.constant 0 : index
    %c0_15 = arith.constant 0 : index
    %14 = vector.load %arg0[%c0_14, %c0_15] : memref<2x136xbf16, #tpu.memory_space<vmem>>, vector<2x136xbf16>
    %cst = arith.constant dense<0.000000e+00> : vector<2x256xf32>
    %15 = tpu.matmul %14, %0, %cst {dimension_numbers = #tpu.dot_dimension_numbers<[1], [0], [0], [1], [0, 0, 1, 1], [], []>} : vector<2x136xbf16>, vector<136x256xbf16>, vector<2x256xf32> -> vector<2x256xf32>
    %cst_16 = arith.constant 0.000000e+00 : f32
    %16 = vector.broadcast %cst_16 : f32 to vector<2x256xf32>
    %17 = arith.maximumf %15, %16 : vector<2x256xf32>
    %18 = arith.truncf %17 : vector<2x256xf32> to vector<2x256xbf16>
    %cst_17 = arith.constant dense<0.000000e+00> : vector<2x32xf32>
    %19 = tpu.matmul %18, %5, %cst_17 {dimension_numbers = #tpu.dot_dimension_numbers<[1], [0], [0], [1], [0, 0, 1, 1], [], []>} : vector<2x256xbf16>, vector<256x32xbf16>, vector<2x32xf32> -> vector<2x32xf32>
    %c0_18 = arith.constant 0 : index
    %c0_19 = arith.constant 0 : index
    %20 = vector.load %arg4[%c0_18, %c0_19] : memref<8x32xf32, #tpu.memory_space<vmem>>, vector<1x32xf32>
    %21 = vector.broadcast %20 : vector<1x32xf32> to vector<2x32xf32>
    %22 = arith.addf %19, %21 : vector<2x32xf32>
    %cst_20 = arith.constant 0.000000e+00 : f32
    %23 = vector.broadcast %cst_20 : f32 to vector<2x32xf32>
    %24 = arith.maximumf %22, %23 : vector<2x32xf32>
    %25 = arith.truncf %24 : vector<2x32xf32> to vector<2x32xbf16>
    %cst_21 = arith.constant dense<0.000000e+00> : vector<2x32xf32>
    %26 = tpu.matmul %25, %9, %cst_21 {dimension_numbers = #tpu.dot_dimension_numbers<[1], [0], [0], [1], [0, 0, 1, 1], [], []>} : vector<2x32xbf16>, vector<32x32xbf16>, vector<2x32xf32> -> vector<2x32xf32>
    %c1 = arith.constant 1 : index
    %c0_22 = arith.constant 0 : index
    %27 = vector.load %arg4[%c1, %c0_22] : memref<8x32xf32, #tpu.memory_space<vmem>>, vector<1x32xf32>
    %28 = vector.broadcast %27 : vector<1x32xf32> to vector<2x32xf32>
    %29 = arith.addf %26, %28 : vector<2x32xf32>
    %cst_23 = arith.constant 0.000000e+00 : f32
    %30 = vector.broadcast %cst_23 : f32 to vector<2x32xf32>
    %31 = arith.maximumf %29, %30 : vector<2x32xf32>
    %c0_24 = arith.constant 0 : index
    %c0_25 = arith.constant 0 : index
    %32 = vector.load %arg1[%c0_24, %c0_25] : memref<160x104xbf16, #tpu.memory_space<vmem>>, vector<160x104xbf16>
    %cst_26 = arith.constant dense<0.000000e+00> : vector<160x72xf32>
    %33 = tpu.matmul %32, %7, %cst_26 {dimension_numbers = #tpu.dot_dimension_numbers<[1], [0], [0], [1], [0, 0, 1, 1], [], []>} : vector<160x104xbf16>, vector<104x72xbf16>, vector<160x72xf32> -> vector<160x72xf32>
    %cst_27 = arith.constant 0.000000e+00 : f32
    %34 = vector.broadcast %cst_27 : f32 to vector<160x72xf32>
    %35 = arith.maximumf %33, %34 : vector<160x72xf32>
    %36 = vector.extract_strided_slice %35 {offsets = [0, 0], sizes = [48, 72], strides = [1, 1]} : vector<160x72xf32> to vector<48x72xf32>
    %37 = vector.extract_strided_slice %36 {offsets = [0, 0], sizes = [8, 72], strides = [1, 1]} : vector<48x72xf32> to vector<8x72xf32>
    %38 = vector.extract_strided_slice %36 {offsets = [8, 0], sizes = [8, 72], strides = [1, 1]} : vector<48x72xf32> to vector<8x72xf32>
    %39 = vector.extract_strided_slice %36 {offsets = [16, 0], sizes = [8, 72], strides = [1, 1]} : vector<48x72xf32> to vector<8x72xf32>
    %40 = vector.extract_strided_slice %36 {offsets = [24, 0], sizes = [8, 72], strides = [1, 1]} : vector<48x72xf32> to vector<8x72xf32>
    %41 = vector.extract_strided_slice %36 {offsets = [32, 0], sizes = [8, 72], strides = [1, 1]} : vector<48x72xf32> to vector<8x72xf32>
    %42 = vector.extract_strided_slice %36 {offsets = [40, 0], sizes = [8, 72], strides = [1, 1]} : vector<48x72xf32> to vector<8x72xf32>
    %43 = arith.maximumf %37, %38 : vector<8x72xf32>
    %44 = arith.maximumf %39, %40 : vector<8x72xf32>
    %45 = arith.maximumf %41, %42 : vector<8x72xf32>
    %46 = arith.maximumf %43, %44 : vector<8x72xf32>
    %47 = arith.maximumf %46, %45 : vector<8x72xf32>
    %48 = arith.truncf %47 : vector<8x72xf32> to vector<8x72xbf16>
    %cst_28 = arith.constant dense<0.000000e+00> : vector<8x256xf32>
    %49 = tpu.matmul %48, %1, %cst_28 {dimension_numbers = #tpu.dot_dimension_numbers<[1], [0], [0], [1], [0, 0, 1, 1], [], []>} : vector<8x72xbf16>, vector<72x256xbf16>, vector<8x256xf32> -> vector<8x256xf32>
    %cst_29 = arith.constant 0.000000e+00 : f32
    %50 = vector.broadcast %cst_29 : f32 to vector<8x256xf32>
    %51 = arith.maximumf %49, %50 : vector<8x256xf32>
    %52 = tpu.concatenate %51, %51, %51, %51, %51, %51, %51 in 0 : vector<8x256xf32>, vector<8x256xf32>, vector<8x256xf32>, vector<8x256xf32>, vector<8x256xf32>, vector<8x256xf32>, vector<8x256xf32> -> vector<56x256xf32>
    %53 = vector.extract_strided_slice %35 {offsets = [48, 0], sizes = [112, 72], strides = [1, 1]} : vector<160x72xf32> to vector<112x72xf32>
    %54 = vector.extract_strided_slice %53 {offsets = [0, 0], sizes = [56, 72], strides = [1, 1]} : vector<112x72xf32> to vector<56x72xf32>
    %55 = vector.extract_strided_slice %53 {offsets = [8, 0], sizes = [56, 72], strides = [1, 1]} : vector<112x72xf32> to vector<56x72xf32>
    %56 = vector.extract_strided_slice %53 {offsets = [16, 0], sizes = [56, 72], strides = [1, 1]} : vector<112x72xf32> to vector<56x72xf32>
    %57 = vector.extract_strided_slice %53 {offsets = [24, 0], sizes = [56, 72], strides = [1, 1]} : vector<112x72xf32> to vector<56x72xf32>
    %58 = vector.extract_strided_slice %53 {offsets = [32, 0], sizes = [56, 72], strides = [1, 1]} : vector<112x72xf32> to vector<56x72xf32>
    %59 = vector.extract_strided_slice %53 {offsets = [40, 0], sizes = [56, 72], strides = [1, 1]} : vector<112x72xf32> to vector<56x72xf32>
    %60 = vector.extract_strided_slice %53 {offsets = [48, 0], sizes = [56, 72], strides = [1, 1]} : vector<112x72xf32> to vector<56x72xf32>
    %61 = vector.extract_strided_slice %53 {offsets = [56, 0], sizes = [56, 72], strides = [1, 1]} : vector<112x72xf32> to vector<56x72xf32>
    %62 = arith.maximumf %54, %55 : vector<56x72xf32>
    %63 = arith.maximumf %56, %57 : vector<56x72xf32>
    %64 = arith.maximumf %58, %59 : vector<56x72xf32>
    %65 = arith.maximumf %60, %61 : vector<56x72xf32>
    %66 = arith.maximumf %62, %63 : vector<56x72xf32>
    %67 = arith.maximumf %64, %65 : vector<56x72xf32>
    %68 = arith.maximumf %66, %67 : vector<56x72xf32>
    %69 = arith.truncf %68 : vector<56x72xf32> to vector<56x72xbf16>
    %cst_30 = arith.constant dense<0.000000e+00> : vector<56x256xf32>
    %70 = tpu.matmul %69, %2, %cst_30 {dimension_numbers = #tpu.dot_dimension_numbers<[1], [0], [0], [1], [0, 0, 1, 1], [], []>} : vector<56x72xbf16>, vector<72x256xbf16>, vector<56x256xf32> -> vector<56x256xf32>
    %cst_31 = arith.constant 0.000000e+00 : f32
    %71 = vector.broadcast %cst_31 : f32 to vector<56x256xf32>
    %72 = arith.maximumf %70, %71 : vector<56x256xf32>
    %73 = arith.mulf %72, %52 : vector<56x256xf32>
    %74 = arith.mulf %73, %4 : vector<56x256xf32>
    %75 = arith.truncf %74 : vector<56x256xf32> to vector<56x256xbf16>
    %cst_32 = arith.constant dense<0.000000e+00> : vector<56x32xf32>
    %76 = tpu.matmul %75, %6, %cst_32 {dimension_numbers = #tpu.dot_dimension_numbers<[1], [0], [0], [1], [0, 0, 1, 1], [], []>} : vector<56x256xbf16>, vector<256x32xbf16>, vector<56x32xf32> -> vector<56x32xf32>
    %77 = arith.truncf %76 : vector<56x32xf32> to vector<56x32xbf16>
    %cst_33 = arith.constant dense<0.000000e+00> : vector<2x32xf32>
    %78 = tpu.matmul %8, %77, %cst_33 {dimension_numbers = #tpu.dot_dimension_numbers<[1], [0], [0], [1], [0, 0, 1, 1], [], []>} : vector<2x56xbf16>, vector<56x32xbf16>, vector<2x32xf32> -> vector<2x32xf32>
    %c2 = arith.constant 2 : index
    %c0_34 = arith.constant 0 : index
    %79 = vector.load %arg4[%c2, %c0_34] : memref<8x32xf32, #tpu.memory_space<vmem>>, vector<1x32xf32>
    %80 = vector.broadcast %79 : vector<1x32xf32> to vector<2x32xf32>
    %81 = arith.addf %78, %80 : vector<2x32xf32>
    %cst_35 = arith.constant 0.000000e+00 : f32
    %82 = vector.broadcast %cst_35 : f32 to vector<2x32xf32>
    %83 = arith.maximumf %81, %82 : vector<2x32xf32>
    %84 = arith.truncf %83 : vector<2x32xf32> to vector<2x32xbf16>
    %cst_36 = arith.constant dense<0.000000e+00> : vector<2x32xf32>
    %85 = tpu.matmul %84, %10, %cst_36 {dimension_numbers = #tpu.dot_dimension_numbers<[1], [0], [0], [1], [0, 0, 1, 1], [], []>} : vector<2x32xbf16>, vector<32x32xbf16>, vector<2x32xf32> -> vector<2x32xf32>
    %c3 = arith.constant 3 : index
    %c0_37 = arith.constant 0 : index
    %86 = vector.load %arg4[%c3, %c0_37] : memref<8x32xf32, #tpu.memory_space<vmem>>, vector<1x32xf32>
    %87 = vector.broadcast %86 : vector<1x32xf32> to vector<2x32xf32>
    %88 = arith.addf %85, %87 : vector<2x32xf32>
    %cst_38 = arith.constant 0.000000e+00 : f32
    %89 = vector.broadcast %cst_38 : f32 to vector<2x32xf32>
    %90 = arith.maximumf %88, %89 : vector<2x32xf32>
    %91 = arith.addf %31, %90 : vector<2x32xf32>
    %92 = arith.truncf %91 : vector<2x32xf32> to vector<2x32xbf16>
    %cst_39 = arith.constant dense<0.000000e+00> : vector<2x32xf32>
    %93 = tpu.matmul %92, %11, %cst_39 {dimension_numbers = #tpu.dot_dimension_numbers<[1], [0], [0], [1], [0, 0, 1, 1], [], []>} : vector<2x32xbf16>, vector<32x32xbf16>, vector<2x32xf32> -> vector<2x32xf32>
    %c4 = arith.constant 4 : index
    %c0_40 = arith.constant 0 : index
    %94 = vector.load %arg4[%c4, %c0_40] : memref<8x32xf32, #tpu.memory_space<vmem>>, vector<1x32xf32>
    %95 = vector.broadcast %94 : vector<1x32xf32> to vector<2x32xf32>
    %96 = arith.addf %93, %95 : vector<2x32xf32>
    %cst_41 = arith.constant 0.000000e+00 : f32
    %97 = vector.broadcast %cst_41 : f32 to vector<2x32xf32>
    %98 = arith.maximumf %96, %97 : vector<2x32xf32>
    %99 = arith.truncf %98 : vector<2x32xf32> to vector<2x32xbf16>
    %cst_42 = arith.constant dense<0.000000e+00> : vector<2x32xf32>
    %100 = tpu.matmul %99, %12, %cst_42 {dimension_numbers = #tpu.dot_dimension_numbers<[1], [0], [0], [1], [0, 0, 1, 1], [], []>} : vector<2x32xbf16>, vector<32x32xbf16>, vector<2x32xf32> -> vector<2x32xf32>
    %c5 = arith.constant 5 : index
    %c0_43 = arith.constant 0 : index
    %101 = vector.load %arg4[%c5, %c0_43] : memref<8x32xf32, #tpu.memory_space<vmem>>, vector<1x32xf32>
    %102 = vector.broadcast %101 : vector<1x32xf32> to vector<2x32xf32>
    %103 = arith.addf %100, %102 : vector<2x32xf32>
    %cst_44 = arith.constant 0.000000e+00 : f32
    %104 = vector.broadcast %cst_44 : f32 to vector<2x32xf32>
    %105 = arith.maximumf %103, %104 : vector<2x32xf32>
    %106 = arith.truncf %105 : vector<2x32xf32> to vector<2x32xbf16>
    %cst_45 = arith.constant dense<0.000000e+00> : vector<2x32xf32>
    %107 = tpu.matmul %106, %13, %cst_45 {dimension_numbers = #tpu.dot_dimension_numbers<[1], [0], [0], [1], [0, 0, 1, 1], [], []>} : vector<2x32xbf16>, vector<32x32xbf16>, vector<2x32xf32> -> vector<2x32xf32>
    %c6 = arith.constant 6 : index
    %c0_46 = arith.constant 0 : index
    %108 = vector.load %arg4[%c6, %c0_46] : memref<8x32xf32, #tpu.memory_space<vmem>>, vector<1x32xf32>
    %109 = vector.broadcast %108 : vector<1x32xf32> to vector<2x32xf32>
    %110 = arith.addf %107, %109 : vector<2x32xf32>
    %cst_47 = arith.constant 0.000000e+00 : f32
    %111 = vector.broadcast %cst_47 : f32 to vector<2x32xf32>
    %112 = arith.maximumf %110, %111 : vector<2x32xf32>
    %cst_48 = arith.constant 1.000000e-01 : f32
    %113 = vector.broadcast %cst_48 : f32 to vector<2x32xf32>
    %114 = arith.mulf %112, %113 : vector<2x32xf32>
    %115 = vector.extract_strided_slice %114 {offsets = [0, 0], sizes = [2, 1], strides = [1, 1]} : vector<2x32xf32> to vector<2x1xf32>
    %c0_49 = arith.constant 0 : index
    %c0_50 = arith.constant 0 : index
    %116 = vector.load %arg5[%c0_49, %c0_50] : memref<2x1xf32, #tpu.memory_space<vmem>>, vector<2x1xf32>
    tpu.vector_store %arg5[%c0_49, %c0_50], %115 {strides = array<i32>} : memref<2x1xf32, #tpu.memory_space<vmem>>, vector<2x1xf32>,
    return
  }
}

</mosaic_0001>

<llo_original>
// kernel: duet_forward_pallas.1
$region0: #{duet_forward_pallas.1}
  #allocation0 [shape = 'u32[]', space=smem, size = 0x4, offset = 0x4, fixed_abs, tag = 'smem constant byte address 0x4 - core index']
  #allocation1 [shape = 'u32[144,128]{1,0:T(1,128)}', space=vmem, size = 0x12000, scoped, tag = 'internal scratch']
  %s0 = inlined_call_operand.vmem [shape: bf16[2,136], index: 0, kind: input, shape index: {}]
  %s1 = inlined_call_operand.vmem [shape: bf16[160,104], index: 1, kind: input, shape index: {}]
  %s2 = inlined_call_operand.vmem [shape: bf16[360,256], index: 2, kind: input, shape index: {}]
  %s3 = inlined_call_operand.vmem [shape: bf16[800,72], index: 3, kind: input, shape index: {}]
  %s4 = inlined_call_operand.vmem [shape: f32[8,32], index: 4, kind: input, shape index: {}]
  %s5 = inlined_call_operand.vmem [shape: f32[2,1], index: 5, kind: output, shape index: {}]
  %s6 = sld [smem:[#allocation0]]
  $region30: #{duet_forward_pallas.1} parent=0
    _
  %s8 = ssub.s32 1, %s6
  %s9 = scalar_select 0, %s8, %s6
  // Predicated region
  $region2: #{duet_forward_pallas.1} parent=0 // pred_check
    _
  $region3: #{duet_forward_pallas.1} parent=0 // pred_check_branch
    %11 = sbr.rel (0) target = $region5
  $region4: #{duet_forward_pallas.1} parent=0 // pred_region
    _
  $region5: #{duet_forward_pallas.1} parent=0 // pred_fallthru
    _
  // Predicated region
  $region6: #{duet_forward_pallas.1} parent=0 // pred_check
    _
  $region7: #{duet_forward_pallas.1} parent=0 // pred_check_branch
    %13 = sbr.rel (0) target = $region9
  $region8: #{duet_forward_pallas.1} parent=0 // pred_region
    _
  $region9: #{duet_forward_pallas.1} parent=0 // pred_fallthru
    _
  // Predicated region
  $region10: #{duet_forward_pallas.1} parent=0 // pred_check
    _
  $region11: #{duet_forward_pallas.1} parent=0 // pred_check_branch
    %15 = sbr.rel (0) target = $region13
  $region12: #{duet_forward_pallas.1} parent=0 // pred_region
    _
  $region13: #{duet_forward_pallas.1} parent=0 // pred_fallthru
    _
  // Predicated region
  $region14: #{duet_forward_pallas.1} parent=0 // pred_check
    _
  $region15: #{duet_forward_pallas.1} parent=0 // pred_check_branch
    %17 = sbr.rel (0) target = $region17
  $region16: #{duet_forward_pallas.1} parent=0 // pred_region
    _
  $region17: #{duet_forward_pallas.1} parent=0 // pred_fallthru
    _
  // Predicated region
  $region18: #{duet_forward_pallas.1} parent=0 // pred_check
    _
  $region19: #{duet_forward_pallas.1} parent=0 // pred_check_branch
    %19 = sbr.rel (0) target = $region21
  $region20: #{duet_forward_pallas.1} parent=0 // pred_region
    _
  $region21: #{duet_forward_pallas.1} parent=0 // pred_fallthru
    _
  %v21 = vld [vmem:[%s2] sm:$0xff]
  %v22 = vld [vmem:[%s2 + $0x8] sm:$0xff]
  %v23 = vld [vmem:[%s2 + $0x10] sm:$0xff]
  %v24 = vld [vmem:[%s2 + $0x18] sm:$0xff]
  %v25 = vld [vmem:[%s2 + $0x20] sm:$0xff]
  %v26 = vld [vmem:[%s2 + $0x28] sm:$0xff]
  %v27 = vld [vmem:[%s2 + $0x30] sm:$0xff]
  %v28 = vld [vmem:[%s2 + $0x38] sm:$0xff]
  %v29 = vld [vmem:[%s2 + $0x40] sm:$0xff]
  %v30 = vld [vmem:[%s2 + $0x48] sm:$0xff]
  %v31 = vld [vmem:[%s2 + $0x50] sm:$0xff]
  %v32 = vld [vmem:[%s2 + $0x58] sm:$0xff]
  %v33 = vld [vmem:[%s2 + $0x60] sm:$0xff]
  %v34 = vld [vmem:[%s2 + $0x68] sm:$0xff]
  %v35 = vld [vmem:[%s2 + $0x70] sm:$0xff]
  %v36 = vld [vmem:[%s2 + $0x78] sm:$0xff]
  %v37 = vld [vmem:[%s2 + $0x80] sm:$0xff]
  %v38 = vld [vmem:[%s2 + $0x90] sm:$0xff]
  %v39 = vld [vmem:[%s2 + $0x98] sm:$0xff]
  %v40 = vld [vmem:[%s2 + $0xa0] sm:$0xff]
  %v41 = vld [vmem:[%s2 + $0xa8] sm:$0xff]
  %v42 = vld [vmem:[%s2 + $0xb0] sm:$0xff]
  %v43 = vld [vmem:[%s2 + $0xb8] sm:$0xff]
  %v44 = vld [vmem:[%s2 + $0xc0] sm:$0xff]
  %v45 = vld [vmem:[%s2 + $0xc8] sm:$0xff]
  %v46 = vld [vmem:[%s2 + $0xd0] sm:$0xff]
  %v47 = vld [vmem:[%s2 + $0xe0] sm:$0xff]
  %v48 = vld [vmem:[%s2 + $0xe8] sm:$0xff]
  %v49 = vld [vmem:[%s2 + $0xf0] sm:$0xff]
  %v50 = vld [vmem:[%s2 + $0xf8] sm:$0xff]
  %v51 = vld [vmem:[%s2 + $0x100] sm:$0xff]
  %v52 = vld [vmem:[%s2 + $0x108] sm:$0xff]
  %v53 = vld [vmem:[%s2 + $0x110] sm:$0xff]
  %v54 = vld [vmem:[%s2 + $0x118] sm:$0xff]
  %v55 = vld [vmem:[%s2 + $0x120] sm:$0xff]
  %v56 = vld [vmem:[%s2 + $0x130] sm:$0xff]
  %v57 = vld [vmem:[%s2 + $0x138] sm:$0xff]
  %v58 = vld [vmem:[%s2 + $0x140] sm:$0xff]
  %v59 = vld [vmem:[%s2 + $0x148] sm:$0xff]
  %v60 = vld [vmem:[%s2 + $0x150] sm:$0xff]
  %v61 = vld [vmem:[%s2 + $0x158] sm:$0xff]
  %v62 = vld [vmem:[%s2 + $0x160] sm:$0xff]
  %v63 = vunpack.c.l.bf16 %v56
  %v64 = vunpack.c.h.bf16 %v56
  %v65 = vunpack.c.l.bf16 %v57
  %v66 = vunpack.c.h.bf16 %v57
  %v67 = vunpack.c.l.bf16 %v58
  %v68 = vunpack.c.h.bf16 %v58
  %v69 = vunpack.c.l.bf16 %v59
  %v70 = vunpack.c.h.bf16 %v59
  %v71 = vunpack.c.l.bf16 %v60
  %v72 = vunpack.c.h.bf16 %v60
  %v73 = vunpack.c.l.bf16 %v61
  %v74 = vunpack.c.h.bf16 %v61
  %v75 = vunpack.c.l.bf16 %v62
  %v76 = vunpack.c.h.bf16 %v62
  %v77 = vld [vmem:[%s3] sm:$0xf]
  %v78 = vld [vmem:[%s3 + $0x4] sm:$0xf]
  %v79 = vld [vmem:[%s3 + $0x8] sm:$0xf]
  %v80 = vld [vmem:[%s3 + $0xc] sm:$0xf]
  %v81 = vld [vmem:[%s3 + $0x10] sm:$0xf]
  %v82 = vld [vmem:[%s3 + $0x14] sm:$0xf]
  %v83 = vld [vmem:[%s3 + $0x18] sm:$0xf]
  %v84 = vld [vmem:[%s3 + $0x1c] sm:$0xf]
  %v85 = vld [vmem:[%s3 + $0x20] sm:$0xf]
  %v86 = vld [vmem:[%s3 + $0x24] sm:$0xf]
  %v87 = vld [vmem:[%s3 + $0x28] sm:$0xf]
  %v88 = vld [vmem:[%s3 + $0x2c] sm:$0xf]
  %v89 = vld [vmem:[%s3 + $0x30] sm:$0xf]
  %v90 = vld [vmem:[%s3 + $0x34] sm:$0xf]
  %v91 = vld [vmem:[%s3 + $0x38] sm:$0xf]
  %v92 = vld [vmem:[%s3 + $0x3c] sm:$0xf]
  %v93 = vld [vmem:[%s3 + $0x40] sm:$0xf]
  %v94 = vld [vmem:[%s3 + $0x44] sm:$0xf]
  %v95 = vld [vmem:[%s3 + $0x48] sm:$0xf]
  %v96 = vld [vmem:[%s3 + $0x4c] sm:$0xf]
  %v97 = vld [vmem:[%s3 + $0x50] sm:$0xf]
  %v98 = vld [vmem:[%s3 + $0x54] sm:$0xf]
  %v99 = vld [vmem:[%s3 + $0x58] sm:$0xf]
  %v100 = vld [vmem:[%s3 + $0x5c] sm:$0xf]
  %v101 = vld [vmem:[%s3 + $0x60] sm:$0xf]
  %v102 = vld [vmem:[%s3 + $0x64] sm:$0xf]
  %v103 = vld [vmem:[%s3 + $0x68] sm:$0xf]
  %v104 = vld [vmem:[%s3 + $0x6c] sm:$0xf]
  %v105 = vld [vmem:[%s3 + $0x70] sm:$0xf]
  %v106 = vld [vmem:[%s3 + $0x74] sm:$0xf]
  %v107 = vld [vmem:[%s3 + $0x78] sm:$0xf]
  %v108 = vld [vmem:[%s3 + $0x7c] sm:$0xf]
  %v109 = vld [vmem:[%s3 + $0x80] sm:$0xf]
  %v110 = vld [vmem:[%s3 + $0x84] sm:$0xf]
  %v111 = vld [vmem:[%s3 + $0x88] sm:$0xf]
  %v112 = vld [vmem:[%s3 + $0x8c] sm:$0xf]
  %v113 = vld [vmem:[%s3 + $0x90] sm:$0xf]
  %v114 = vld [vmem:[%s3 + $0x94] sm:$0xf]
  %v115 = vld [vmem:[%s3 + $0x98] sm:$0xf]
  %v116 = vld [vmem:[%s3 + $0x9c] sm:$0xf]
  %v117 = vld [vmem:[%s3 + $0xa0] sm:$0xf]
  %v118 = vld [vmem:[%s3 + $0xa4] sm:$0xf]
  %v119 = vld [vmem:[%s3 + $0xa8] sm:$0xf]
  %v120 = vld [vmem:[%s3 + $0xac] sm:$0xf]
  %v121 = vld [vmem:[%s3 + $0xb0] sm:$0xf]
  %v122 = vld [vmem:[%s3 + $0xb4] sm:$0xf]
  %v123 = vld [vmem:[%s3 + $0xb8] sm:$0xf]
  %v124 = vld [vmem:[%s3 + $0xbc] sm:$0xf]
  %v125 = vld [vmem:[%s3 + $0xc0] sm:$0xf]
  %v126 = vld [vmem:[%s3 + $0xc4] sm:$0xf]
  %v127 = vld [vmem:[%s3 + $0xc8] sm:$0xf]
  %v128 = vld [vmem:[%s3 + $0xcc] sm:$0xf]
  %v129 = vld [vmem:[%s3 + $0xd0] sm:$0xf]
  %v130 = vld [vmem:[%s3 + $0xd4] sm:$0xf]
  %v131 = vld [vmem:[%s3 + $0xd8] sm:$0xf]
  %v132 = vld [vmem:[%s3 + $0xdc] sm:$0xf]
  %v133 = vld [vmem:[%s3 + $0xe0] sm:$0xf]
  %v134 = vld [vmem:[%s3 + $0xe4] sm:$0xf]
  %v135 = vld [vmem:[%s3 + $0xe8] sm:$0xf]
  %v136 = vld [vmem:[%s3 + $0xec] sm:$0xf]
  %v137 = vld [vmem:[%s3 + $0xf0] sm:$0xf]
  %v138 = vld [vmem:[%s3 + $0xf4] sm:$0xf]
  %v139 = vld [vmem:[%s3 + $0xf8] sm:$0xf]
  %v140 = vld [vmem:[%s3 + $0xfc] sm:$0xf]
  %v141 = vld [vmem:[%s3 + $0x100] sm:$0xf]
  %v142 = vld [vmem:[%s3 + $0x104] sm:$0xf]
  %v143 = vld [vmem:[%s3 + $0x108] sm:$0xf]
  %v144 = vld [vmem:[%s3 + $0x10c] sm:$0xf]
  %v145 = vld [vmem:[%s3 + $0x110] sm:$0xf]
  %v146 = vld [vmem:[%s3 + $0x114] sm:$0xf]
  %v147 = vld [vmem:[%s3 + $0x118] sm:$0xf]
  %v148 = vld [vmem:[%s3 + $0x11c] sm:$0xf]
  %v149 = vld [vmem:[%s3 + $0x120] sm:$0xf]
  %v150 = vld [vmem:[%s3 + $0x124] sm:$0xf]
  %v151 = vld [vmem:[%s3 + $0x128] sm:$0xf]
  %v152 = vld [vmem:[%s3 + $0x12c] sm:$0xf]
  %v153 = vld [vmem:[%s3 + $0x130] sm:$0xf]
  %v154 = vld [vmem:[%s3 + $0x138] sm:$0x1]
  %v155 = vld [vmem:[%s3 + $0x140] sm:$0xf]
  %v156 = vld [vmem:[%s3 + $0x144] sm:$0xf]
  %v157 = vld [vmem:[%s3 + $0x148] sm:$0xf]
  %v158 = vld [vmem:[%s3 + $0x14c] sm:$0xf]
  %v159 = vld [vmem:[%s3 + $0x150] sm:$0xf]
  %v160 = vld [vmem:[%s3 + $0x154] sm:$0xf]
  %v161 = vld [vmem:[%s3 + $0x158] sm:$0xf]
  %v162 = vld [vmem:[%s3 + $0x15c] sm:$0xf]
  %v163 = vld [vmem:[%s3 + $0x160] sm:$0xf]
  %v164 = vld [vmem:[%s3 + $0x164] sm:$0xf]
  %v165 = vld [vmem:[%s3 + $0x168] sm:$0xf]
  %v166 = vld [vmem:[%s3 + $0x16c] sm:$0xf]
  %v167 = vld [vmem:[%s3 + $0x170] sm:$0xf]
  %v168 = vld [vmem:[%s3 + $0x174] sm:$0xf]
  %v169 = vld [vmem:[%s3 + $0x178] sm:$0xf]
  %v170 = vld [vmem:[%s3 + $0x17c] sm:$0xf]
  %v171 = vld [vmem:[%s3 + $0x180] sm:$0xf]
  %v172 = vld [vmem:[%s3 + $0x184] sm:$0xf]
  %v173 = vld [vmem:[%s3 + $0x188] sm:$0xf]
  %v174 = vld [vmem:[%s3 + $0x18c] sm:$0xf]
  %v175 = vld [vmem:[%s0] sm:$0x3]
  %v178 = vunpack.c.l.s4 1966171168
  %v179 = vunpack.c.0.s8 %v178
  %v180 = vlaneseq
  %v181 = vshrl.u32 %v180, 7
  %v182 = vsub.s32 %v179, %v181
  %v183 = vrot.slane %v175, %v182
  %v184 = vcombine.high %v183, %v183
  %v186 = vunpack.c.l.s4 1966171168
  %v187 = vunpack.c.0.s8 %v186
  %v188 = vlaneseq
  %v189 = vshrl.u32 %v188, 7
  %v190 = vsub.s32 %v187, %v189
  %v191 = vrot.slane %v183, %v190
  %v193 = vunpack.c.l.s4 1966171168
  %v194 = vunpack.c.0.s8 %v193
  %v195 = vlaneseq
  %v196 = vshrl.u32 %v195, 7
  %v197 = vsub.s32 %v194, %v196
  %v198 = vrot.slane %v184, %v197
  %v217 = vunpack.c.l.b16 %v21
  %v218 = vunpack.c.h.b16 %v21
  %v219 = vunpack.c.l.b16 %v22
  %v220 = vunpack.c.h.b16 %v22
  %v221 = vunpack.c.l.b16 %v23
  %v222 = vunpack.c.h.b16 %v23
  %v223 = vunpack.c.l.b16 %v24
  %v224 = vunpack.c.h.b16 %v24
  %v225 = vunpack.c.l.b16 %v25
  %v226 = vunpack.c.h.b16 %v25
  %v227 = vunpack.c.l.b16 %v26
  %v228 = vunpack.c.h.b16 %v26
  %v229 = vunpack.c.l.b16 %v27
  %v230 = vunpack.c.h.b16 %v27
  %v231 = vunpack.c.l.b16 %v28
  %v232 = vunpack.c.h.b16 %v28
  %v233 = vunpack.c.l.b16 %v29
  %v234 = vunpack.c.h.b16 %v29
  %v235 = vunpack.c.l.b16 %v30
  %v236 = vunpack.c.h.b16 %v30
  %v237 = vunpack.c.l.b16 %v31
  %v238 = vunpack.c.h.b16 %v31
  %v239 = vunpack.c.l.b16 %v32
  %v240 = vunpack.c.h.b16 %v32
  %v241 = vunpack.c.l.b16 %v33
  %v242 = vunpack.c.h.b16 %v33
  %v243 = vunpack.c.l.b16 %v34
  %v244 = vunpack.c.h.b16 %v34
  %v245 = vunpack.c.l.b16 %v35
  %v246 = vunpack.c.h.b16 %v35
  %v247 = vunpack.c.l.b16 %v36
  %v248 = vunpack.c.h.b16 %v36
  %v249 = vunpack.c.l.b16 %v37
  %v250 = vunpack.c.h.b16 %v37
  %v251 = vpack.c.b16 %v219, %v217
  %v252 = vpack.c.b16 %v220, %v218
  %v253 = vpack.c.b16 %v223, %v221
  %v254 = vpack.c.b16 %v224, %v222
  %v255 = vpack.c.b16 %v227, %v225
  %v256 = vpack.c.b16 %v228, %v226
  %v257 = vpack.c.b16 %v231, %v229
  %v258 = vpack.c.b16 %v232, %v230
  %v259 = vpack.c.b16 %v235, %v233
  %v260 = vpack.c.b16 %v236, %v234
  %v261 = vpack.c.b16 %v239, %v237
  %v262 = vpack.c.b16 %v240, %v238
  %v263 = vpack.c.b16 %v243, %v241
  %v264 = vpack.c.b16 %v244, %v242
  %v265 = vpack.c.b16 %v247, %v245
  %v266 = vpack.c.b16 %v248, %v246
  %v267 = vpack.c.b16 %v249, %v249
  %v268 = vpack.c.b16 %v250, %v250
  %vm285 = vcmask 64512
  %v287 = vsel %vm285, %v198, 0
  %vm289 = vcmask 1043456
  %v291 = vsel %vm289, %v267, 0
  %v294 = vsel %vm289, %v268, 0
  %296 = vmatprep.subr.bf16.mxu0 %v252
  %297 = vmatpush1.bf16.msra.mxu0 %v251
  %298 = vmatprep.subr.bf16.mxu0 %v254
  %299 = vmatpush1.bf16.msra.mxu0 %v253
  %300 = vmatprep.subr.bf16.mxu0 %v256
  %301 = vmatpush1.bf16.msra.mxu0 %v255
  %302 = vmatprep.subr.bf16.mxu0 %v258
  %303 = vmatpush1.bf16.msra.mxu0 %v257
  %304 = vmatprep.subr.bf16.mxu0 %v260
  %305 = vmatpush1.bf16.msra.mxu0 %v259
  %306 = vmatprep.subr.bf16.mxu0 %v262
  %307 = vmatpush1.bf16.msra.mxu0 %v261
  %308 = vmatprep.subr.bf16.mxu0 %v264
  %309 = vmatpush1.bf16.msra.mxu0 %v263
  %310 = vmatprep.subr.bf16.mxu0 %v266
  %311 = vmatpush1.bf16.msra.mxu0 %v265
  %312 = vmatprep.subr.bf16.mxu0 %v294
  %313 = vmatpush1.bf16.msra.mxu0 %v291
  %314 = vmatprep.subr.bf16.mxu0 0
  %315 = vmatpush1.bf16.msra.mxu0 0
  %316 = vmatprep.subr.bf16.mxu0 0
  %317 = vmatpush1.bf16.msra.mxu0 0
  %318 = vmatprep.subr.bf16.mxu0 0
  %319 = vmatpush1.bf16.msra.mxu0 0
  %320 = vmatprep.subr.bf16.mxu0 0
  %321 = vmatpush1.bf16.msra.mxu0 0
  %322 = vmatprep.subr.bf16.mxu0 0
  %323 = vmatpush1.bf16.msra.mxu0 0
  %324 = vmatprep.subr.bf16.mxu0 0
  %325 = vmatpush1.bf16.msra.mxu0 0
  %326 = vmatprep.subr.bf16.mxu0 0
  %327 = vmatpush1.bf16.msra.mxu0 0
  %328 = vmatprep.mubr.bf16.mxu0 %v287
  %329 = vmatmul.mubr.bf16.gmra.mrb[0].mxu0 %v191
  %v330 = vpop.f32.mrb[0].mxu0
  %v331 = vadd.f32 0.0, %v330
  %v332 = vpop.f32.mrb[0].mxu0
  %v333 = vadd.f32 0.0, %v332
  %v334 = vpop.f32.mrb[0].mxu0
  %v335 = vpop.f32.mrb[0].mxu0
  %336 = vdwg.mxu0
  %v337 = vmax.f32 %v331, 0.0
  %v338 = vmax.f32 %v333, 0.0
  %v339 = vpack.c.bf16 %v337, %v337
  %v340 = vpack.c.bf16 %v338, %v338
  %v341 = vld [vmem:[%s4] sm:$0x1]
  %v342 = vlaneseq
  %v343 = vshrl.u32 %v342, 7
  %v344 = vsub.s32 0, %v343
  %v345 = vrot.slane %v341, %v344
  %v378 = vunpack.c.l.b16 %v77
  %v379 = vunpack.c.l.b16 %v78
  %v380 = vunpack.c.l.b16 %v79
  %v381 = vunpack.c.l.b16 %v80
  %v382 = vunpack.c.l.b16 %v81
  %v383 = vunpack.c.l.b16 %v82
  %v384 = vunpack.c.l.b16 %v83
  %v385 = vunpack.c.l.b16 %v84
  %v386 = vunpack.c.l.b16 %v85
  %v387 = vunpack.c.l.b16 %v86
  %v388 = vunpack.c.l.b16 %v87
  %v389 = vunpack.c.l.b16 %v88
  %v390 = vunpack.c.l.b16 %v89
  %v391 = vunpack.c.l.b16 %v90
  %v392 = vunpack.c.l.b16 %v91
  %v393 = vunpack.c.l.b16 %v92
  %v394 = vunpack.c.l.b16 %v93
  %v395 = vunpack.c.l.b16 %v94
  %v396 = vunpack.c.l.b16 %v95
  %v397 = vunpack.c.l.b16 %v96
  %v398 = vunpack.c.l.b16 %v97
  %v399 = vunpack.c.l.b16 %v98
  %v400 = vunpack.c.l.b16 %v99
  %v401 = vunpack.c.l.b16 %v100
  %v402 = vunpack.c.l.b16 %v101
  %v403 = vunpack.c.l.b16 %v102
  %v404 = vunpack.c.l.b16 %v103
  %v405 = vunpack.c.l.b16 %v104
  %v406 = vunpack.c.l.b16 %v105
  %v407 = vunpack.c.l.b16 %v106
  %v408 = vunpack.c.l.b16 %v107
  %v409 = vunpack.c.l.b16 %v108
  %v410 = vpack.c.b16 %v379, %v378
  %v411 = vpack.c.b16 %v381, %v380
  %v412 = vpack.c.b16 %v383, %v382
  %v413 = vpack.c.b16 %v385, %v384
  %v414 = vpack.c.b16 %v387, %v386
  %v415 = vpack.c.b16 %v389, %v388
  %v416 = vpack.c.b16 %v391, %v390
  %v417 = vpack.c.b16 %v393, %v392
  %v418 = vpack.c.b16 %v395, %v394
  %v419 = vpack.c.b16 %v397, %v396
  %v420 = vpack.c.b16 %v399, %v398
  %v421 = vpack.c.b16 %v401, %v400
  %v422 = vpack.c.b16 %v403, %v402
  %v423 = vpack.c.b16 %v405, %v404
  %v424 = vpack.c.b16 %v407, %v406
  %v425 = vpack.c.b16 %v409, %v408
  %442 = vmatprep.subr.bf16.mxu0 0
  %443 = vmatpush1.bf16.msra.mxu0 %v410
  %444 = vmatprep.subr.bf16.mxu0 0
  %445 = vmatpush1.bf16.msra.mxu0 %v411
  %446 = vmatprep.subr.bf16.mxu0 0
  %447 = vmatpush1.bf16.msra.mxu0 %v412
  %448 = vmatprep.subr.bf16.mxu0 0
  %449 = vmatpush1.bf16.msra.mxu0 %v413
  %450 = vmatprep.subr.bf16.mxu0 0
  %451 = vmatpush1.bf16.msra.mxu0 %v414
  %452 = vmatprep.subr.bf16.mxu0 0
  %453 = vmatpush1.bf16.msra.mxu0 %v415
  %454 = vmatprep.subr.bf16.mxu0 0
  %455 = vmatpush1.bf16.msra.mxu0 %v416
  %456 = vmatprep.subr.bf16.mxu0 0
  %457 = vmatpush1.bf16.msra.mxu0 %v417
  %458 = vmatprep.subr.bf16.mxu0 0
  %459 = vmatpush1.bf16.msra.mxu0 %v418
  %460 = vmatprep.subr.bf16.mxu0 0
  %461 = vmatpush1.bf16.msra.mxu0 %v419
  %462 = vmatprep.subr.bf16.mxu0 0
  %463 = vmatpush1.bf16.msra.mxu0 %v420
  %464 = vmatprep.subr.bf16.mxu0 0
  %465 = vmatpush1.bf16.msra.mxu0 %v421
  %466 = vmatprep.subr.bf16.mxu0 0
  %467 = vmatpush1.bf16.msra.mxu0 %v422
  %468 = vmatprep.subr.bf16.mxu0 0
  %469 = vmatpush1.bf16.msra.mxu0 %v423
  %470 = vmatprep.subr.bf16.mxu0 0
  %471 = vmatpush1.bf16.msra.mxu0 %v424
  %472 = vmatprep.subr.bf16.mxu0 0
  %473 = vmatpush1.bf16.msra.mxu0 %v425
  %474 = vmatprep.mubr.bf16.mxu0 %v340
  %475 = vmatmul.mubr.bf16.gmra.mrb[0].mxu0 %v339
  %v476 = vpop.f32.mrb[0].mxu0
  %v477 = vadd.f32 %v345, %v476
  %v478 = vpop.f32.mrb[0].mxu0
  %v479 = vpop.f32.mrb[0].mxu0
  %v480 = vpop.f32.mrb[0].mxu0
  %481 = vdwg.mxu0
  %v482 = vmax.f32 %v477, 0.0
  %v483 = vpack.c.bf16 %v482, %v482
  %v484 = vld [vmem:[%s4 + $0x1] sm:$0x1]
  %v485 = vlaneseq
  %v486 = vshrl.u32 %v485, 7
  %v487 = vsub.s32 0, %v486
  %v488 = vrot.slane %v484, %v487
  %v493 = vunpack.c.l.b16 %v155
  %v494 = vunpack.c.l.b16 %v156
  %v495 = vunpack.c.l.b16 %v157
  %v496 = vunpack.c.l.b16 %v158
  %v497 = vpack.c.b16 %v494, %v493
  %v498 = vpack.c.b16 %v496, %v495
  %vm501 = vcmask 261120
  %v503 = vsel %vm501, %v483, 0
  %505 = vmatprep.subr.bf16.mxu0 0
  %506 = vmatpush1.bf16.msra.mxu0 %v497
  %507 = vmatprep.subr.bf16.mxu0 0
  %508 = vmatpush1.bf16.msra.mxu0 %v498
  %509 = vmatprep.subr.bf16.mxu0 0
  %510 = vmatpush1.bf16.msra.mxu0 0
  %511 = vmatprep.subr.bf16.mxu0 0
  %512 = vmatpush1.bf16.msra.mxu0 0
  %513 = vmatprep.subr.bf16.mxu0 0
  %514 = vmatpush1.bf16.msra.mxu0 0
  %515 = vmatprep.subr.bf16.mxu0 0
  %516 = vmatpush1.bf16.msra.mxu0 0
  %517 = vmatprep.subr.bf16.mxu0 0
  %518 = vmatpush1.bf16.msra.mxu0 0
  %519 = vmatprep.subr.bf16.mxu0 0
  %520 = vmatpush1.bf16.msra.mxu0 0
  %521 = vmatprep.subr.bf16.mxu0 0
  %522 = vmatpush1.bf16.msra.mxu0 0
  %523 = vmatprep.subr.bf16.mxu0 0
  %524 = vmatpush1.bf16.msra.mxu0 0
  %525 = vmatprep.subr.bf16.mxu0 0
  %526 = vmatpush1.bf16.msra.mxu0 0
  %527 = vmatprep.subr.bf16.mxu0 0
  %528 = vmatpush1.bf16.msra.mxu0 0
  %529 = vmatprep.subr.bf16.mxu0 0
  %530 = vmatpush1.bf16.msra.mxu0 0
  %531 = vmatprep.subr.bf16.mxu0 0
  %532 = vmatpush1.bf16.msra.mxu0 0
  %533 = vmatprep.subr.bf16.mxu0 0
  %534 = vmatpush1.bf16.msra.mxu0 0
  %535 = vmatprep.subr.bf16.mxu0 0
  %536 = vmatpush1.bf16.msra.mxu0 0
  %537 = vmatprep.mubr.bf16.mxu0 0
  %538 = vmatmul.mubr.bf16.gmra.mrb[0].mxu0 %v503
  %v539 = vpop.f32.mrb[0].mxu0
  %v540 = vadd.f32 %v488, %v539
  %v541 = vpop.f32.mrb[0].mxu0
  %v542 = vpop.f32.mrb[0].mxu0
  %v543 = vpop.f32.mrb[0].mxu0
  %544 = vdwg.mxu0
  %v545 = vmax.f32 %v540, 0.0
  %v546 = vld [vmem:[%s1] sm:$0xf]
  %v547 = vld [vmem:[%s1 + $0x4] sm:$0xf]
  %v548 = vld [vmem:[%s1 + $0x8] sm:$0xf]
  %v549 = vld [vmem:[%s1 + $0xc] sm:$0xf]
  %v550 = vld [vmem:[%s1 + $0x10] sm:$0xf]
  %v551 = vld [vmem:[%s1 + $0x14] sm:$0xf]
  %v552 = vld [vmem:[%s1 + $0x18] sm:$0xf]
  %v553 = vld [vmem:[%s1 + $0x1c] sm:$0xf]
  %v554 = vld [vmem:[%s1 + $0x20] sm:$0xf]
  %v555 = vld [vmem:[%s1 + $0x24] sm:$0xf]
  %v556 = vld [vmem:[%s1 + $0x28] sm:$0xf]
  %v557 = vld [vmem:[%s1 + $0x2c] sm:$0xf]
  %v558 = vld [vmem:[%s1 + $0x30] sm:$0xf]
  %v559 = vld [vmem:[%s1 + $0x34] sm:$0xf]
  %v560 = vld [vmem:[%s1 + $0x38] sm:$0xf]
  %v561 = vld [vmem:[%s1 + $0x3c] sm:$0xf]
  %v562 = vld [vmem:[%s1 + $0x40] sm:$0xf]
  %v563 = vld [vmem:[%s1 + $0x44] sm:$0xf]
  %v564 = vld [vmem:[%s1 + $0x48] sm:$0xf]
  %v565 = vld [vmem:[%s1 + $0x4c] sm:$0xf]
  %v586 = vunpack.c.l.b16 %v546
  %v587 = vunpack.c.l.b16 %v547
  %v588 = vunpack.c.l.b16 %v548
  %v589 = vunpack.c.l.b16 %v549
  %v590 = vunpack.c.l.b16 %v550
  %v591 = vunpack.c.l.b16 %v551
  %v592 = vunpack.c.l.b16 %v552
  %v593 = vunpack.c.l.b16 %v553
  %v594 = vunpack.c.l.b16 %v554
  %v595 = vunpack.c.l.b16 %v555
  %v596 = vunpack.c.l.b16 %v556
  %v597 = vunpack.c.l.b16 %v557
  %v598 = vunpack.c.l.b16 %v558
  %v599 = vunpack.c.l.b16 %v559
  %v600 = vunpack.c.l.b16 %v560
  %v601 = vunpack.c.l.b16 %v561
  %v602 = vunpack.c.l.b16 %v562
  %v603 = vunpack.c.l.b16 %v563
  %v604 = vunpack.c.l.b16 %v564
  %v605 = vunpack.c.l.b16 %v565
  %v606 = vpack.c.b16 %v587, %v586
  %v607 = vpack.c.b16 %v589, %v588
  %v608 = vpack.c.b16 %v591, %v590
  %v609 = vpack.c.b16 %v593, %v592
  %v610 = vpack.c.b16 %v595, %v594
  %v611 = vpack.c.b16 %v597, %v596
  %v612 = vpack.c.b16 %v599, %v598
  %v613 = vpack.c.b16 %v601, %v600
  %v614 = vpack.c.b16 %v603, %v602
  %v615 = vpack.c.b16 %v605, %v604
  %v629 = vunpack.c.l.b16 %v141
  %v630 = vunpack.c.l.b16 %v142
  %v631 = vunpack.c.l.b16 %v143
  %v632 = vunpack.c.l.b16 %v144
  %v633 = vunpack.c.l.b16 %v145
  %v634 = vunpack.c.l.b16 %v146
  %v635 = vunpack.c.l.b16 %v147
  %v636 = vunpack.c.l.b16 %v148
  %v637 = vunpack.c.l.b16 %v149
  %v638 = vunpack.c.l.b16 %v150
  %v639 = vunpack.c.l.b16 %v151
  %v640 = vunpack.c.l.b16 %v152
  %v641 = vunpack.c.l.b16 %v153
  %v642 = vpack.c.b16 %v630, %v629
  %v643 = vpack.c.b16 %v632, %v631
  %v644 = vpack.c.b16 %v634, %v633
  %v645 = vpack.c.b16 %v636, %v635
  %v646 = vpack.c.b16 %v638, %v637
  %v647 = vpack.c.b16 %v640, %v639
  %v648 = vpack.c.b16 %v641, %v641
  %vm655 = vcmask 850944
  %v657 = vsel %vm655, %v606, 0
  %v660 = vsel %vm655, %v607, 0
  %v663 = vsel %vm655, %v608, 0
  %v666 = vsel %vm655, %v609, 0
  %v669 = vsel %vm655, %v610, 0
  %v672 = vsel %vm655, %v611, 0
  %v675 = vsel %vm655, %v612, 0
  %v678 = vsel %vm655, %v613, 0
  %v681 = vsel %vm655, %v614, 0
  %v684 = vsel %vm655, %v615, 0
  %v687 = vsel %vm289, %v648, 0
  %689 = vmatprep.subr.bf16.mxu0 0
  %690 = vmatpush1.bf16.msra.mxu0 %v642
  %691 = vmatprep.subr.bf16.mxu0 0
  %692 = vmatpush1.bf16.msra.mxu0 %v643
  %693 = vmatprep.subr.bf16.mxu0 0
  %694 = vmatpush1.bf16.msra.mxu0 %v644
  %695 = vmatprep.subr.bf16.mxu0 0
  %696 = vmatpush1.bf16.msra.mxu0 %v645
  %697 = vmatprep.subr.bf16.mxu0 0
  %698 = vmatpush1.bf16.msra.mxu0 %v646
  %699 = vmatprep.subr.bf16.mxu0 0
  %700 = vmatpush1.bf16.msra.mxu0 %v647
  %701 = vmatprep.subr.bf16.mxu0 0
  %702 = vmatpush1.bf16.msra.mxu0 %v687
  %703 = vmatprep.subr.bf16.mxu0 0
  %704 = vmatpush1.bf16.msra.mxu0 0
  %705 = vmatprep.subr.bf16.mxu0 0
  %706 = vmatpush1.bf16.msra.mxu0 0
  %707 = vmatprep.subr.bf16.mxu0 0
  %708 = vmatpush1.bf16.msra.mxu0 0
  %709 = vmatprep.subr.bf16.mxu0 0
  %710 = vmatpush1.bf16.msra.mxu0 0
  %711 = vmatprep.subr.bf16.mxu0 0
  %712 = vmatpush1.bf16.msra.mxu0 0
  %713 = vmatprep.subr.bf16.mxu0 0
  %714 = vmatpush1.bf16.msra.mxu0 0
  %715 = vmatprep.subr.bf16.mxu0 0
  %716 = vmatpush1.bf16.msra.mxu0 0
  %717 = vmatprep.subr.bf16.mxu0 0
  %718 = vmatpush1.bf16.msra.mxu0 0
  %719 = vmatprep.subr.bf16.mxu0 0
  %720 = vmatpush1.bf16.msra.mxu0 0
  %721 = vmatprep.mubr.bf16.mxu0 0
  %722 = vmatmul.mubr.bf16.gmra.mrb[0].mxu0 %v657
  %v723 = vpop.f32.mrb[0].mxu0
  %v724 = vadd.f32 0.0, %v723
  %v725 = vpop.f32.mrb[0].mxu0
  %v726 = vpop.f32.mrb[0].mxu0
  %v727 = vadd.f32 0.0, %v726
  %v728 = vpop.f32.mrb[0].mxu0
  %729 = vmatprep.mubr.bf16.mxu0 0
  %730 = vmatmul.mubr.bf16.gmra.mrb[0].mxu0 %v660
  %v731 = vpop.f32.mrb[0].mxu0
  %v732 = vadd.f32 0.0, %v731
  %v733 = vpop.f32.mrb[0].mxu0
  %v734 = vpop.f32.mrb[0].mxu0
  %v735 = vadd.f32 0.0, %v734
  %v736 = vpop.f32.mrb[0].mxu0
  %737 = vmatprep.mubr.bf16.mxu0 0
  %738 = vmatmul.mubr.bf16.gmra.mrb[0].mxu0 %v663
  %v739 = vpop.f32.mrb[0].mxu0
  %v740 = vadd.f32 0.0, %v739
  %v741 = vpop.f32.mrb[0].mxu0
  %v742 = vpop.f32.mrb[0].mxu0
  %v743 = vadd.f32 0.0, %v742
  %v744 = vpop.f32.mrb[0].mxu0
  %745 = vmatprep.mubr.bf16.mxu0 0
  %746 = vmatmul.mubr.bf16.gmra.mrb[0].mxu0 %v666
  %v747 = vpop.f32.mrb[0].mxu0
  %v748 = vadd.f32 0.0, %v747
  %v749 = vpop.f32.mrb[0].mxu0
  %v750 = vpop.f32.mrb[0].mxu0
  %v751 = vadd.f32 0.0, %v750
  %v752 = vpop.f32.mrb[0].mxu0
  %753 = vmatprep.mubr.bf16.mxu0 0
  %754 = vmatmul.mubr.bf16.gmra.mrb[0].mxu0 %v669
  %v755 = vpop.f32.mrb[0].mxu0
  %v756 = vadd.f32 0.0, %v755
  %v757 = vpop.f32.mrb[0].mxu0
  %v758 = vpop.f32.mrb[0].mxu0
  %v759 = vadd.f32 0.0, %v758
  %v760 = vpop.f32.mrb[0].mxu0
  %761 = vmatprep.mubr.bf16.mxu0 0
  %762 = vmatmul.mubr.bf16.gmra.mrb[0].mxu0 %v672
  %v763 = vpop.f32.mrb[0].mxu0
  %v764 = vadd.f32 0.0, %v763
  %v765 = vpop.f32.mrb[0].mxu0
  %v766 = vpop.f32.mrb[0].mxu0
  %v767 = vadd.f32 0.0, %v766
  %v768 = vpop.f32.mrb[0].mxu0
  %769 = vmatprep.mubr.bf16.mxu0 0
  %770 = vmatmul.mubr.bf16.gmra.mrb[0].mxu0 %v675
  %v771 = vpop.f32.mrb[0].mxu0
  %v772 = vadd.f32 0.0, %v771
  %v773 = vpop.f32.mrb[0].mxu0
  %v774 = vpop.f32.mrb[0].mxu0
  %v775 = vadd.f32 0.0, %v774
  %v776 = vpop.f32.mrb[0].mxu0
  %777 = vmatprep.mubr.bf16.mxu0 0
  %778 = vmatmul.mubr.bf16.gmra.mrb[0].mxu0 %v678
  %v779 = vpop.f32.mrb[0].mxu0
  %v780 = vadd.f32 0.0, %v779
  %v781 = vpop.f32.mrb[0].mxu0
  %v782 = vpop.f32.mrb[0].mxu0
  %v783 = vadd.f32 0.0, %v782
  %v784 = vpop.f32.mrb[0].mxu0
  %785 = vmatprep.mubr.bf16.mxu0 0
  %786 = vmatmul.mubr.bf16.gmra.mrb[0].mxu0 %v681
  %v787 = vpop.f32.mrb[0].mxu0
  %v788 = vadd.f32 0.0, %v787
  %v789 = vpop.f32.mrb[0].mxu0
  %v790 = vpop.f32.mrb[0].mxu0
  %v791 = vadd.f32 0.0, %v790
  %v792 = vpop.f32.mrb[0].mxu0
  %793 = vmatprep.mubr.bf16.mxu0 0
  %794 = vmatmul.mubr.bf16.gmra.mrb[0].mxu0 %v684
  %v795 = vpop.f32.mrb[0].mxu0
  %v796 = vadd.f32 0.0, %v795
  %v797 = vpop.f32.mrb[0].mxu0
  %v798 = vpop.f32.mrb[0].mxu0
  %v799 = vadd.f32 0.0, %v798
  %v800 = vpop.f32.mrb[0].mxu0
  %801 = vdwg.mxu0
  %v802 = vmax.f32 %v724, 0.0
  %v803 = vmax.f32 %v727, 0.0
  %v804 = vmax.f32 %v732, 0.0
  %v805 = vmax.f32 %v735, 0.0
  %v806 = vmax.f32 %v740, 0.0
  %v807 = vmax.f32 %v743, 0.0
  %v808 = vmax.f32 %v748, 0.0
  %v809 = vmax.f32 %v751, 0.0
  %v810 = vmax.f32 %v756, 0.0
  %v811 = vmax.f32 %v759, 0.0
  %v812 = vmax.f32 %v764, 0.0
  %v813 = vmax.f32 %v767, 0.0
  %v814 = vmax.f32 %v772, 0.0
  %v815 = vmax.f32 %v775, 0.0
  %v816 = vmax.f32 %v780, 0.0
  %v817 = vmax.f32 %v783, 0.0
  %v818 = vmax.f32 %v788, 0.0
  %v819 = vmax.f32 %v791, 0.0
  %v820 = vmax.f32 %v796, 0.0
  %v821 = vmax.f32 %v799, 0.0
  %v822 = vmax.f32 %v802, %v803
  %v823 = vmax.f32 %v804, %v805
  %v824 = vmax.f32 %v806, %v807
  %v825 = vmax.f32 %v822, %v823
  %v826 = vmax.f32 %v825, %v824
  %v827 = vpack.c.bf16 %v826, %v826
  %v837 = vunpack.c.l.b16 %v38
  %v838 = vunpack.c.h.b16 %v38
  %v839 = vunpack.c.l.b16 %v39
  %v840 = vunpack.c.h.b16 %v39
  %v841 = vunpack.c.l.b16 %v40
  %v842 = vunpack.c.h.b16 %v40
  %v843 = vunpack.c.l.b16 %v41
  %v844 = vunpack.c.h.b16 %v41
  %v845 = vunpack.c.l.b16 %v42
  %v846 = vunpack.c.h.b16 %v42
  %v847 = vunpack.c.l.b16 %v43
  %v848 = vunpack.c.h.b16 %v43
  %v849 = vunpack.c.l.b16 %v44
  %v850 = vunpack.c.h.b16 %v44
  %v851 = vunpack.c.l.b16 %v45
  %v852 = vunpack.c.h.b16 %v45
  %v853 = vunpack.c.l.b16 %v46
  %v854 = vunpack.c.h.b16 %v46
  %v855 = vpack.c.b16 %v839, %v837
  %v856 = vpack.c.b16 %v840, %v838
  %v857 = vpack.c.b16 %v843, %v841
  %v858 = vpack.c.b16 %v844, %v842
  %v859 = vpack.c.b16 %v847, %v845
  %v860 = vpack.c.b16 %v848, %v846
  %v861 = vpack.c.b16 %v851, %v849
  %v862 = vpack.c.b16 %v852, %v850
  %v863 = vpack.c.b16 %v853, %v853
  %v864 = vpack.c.b16 %v854, %v854
  %vm873 = vcmask 588800
  %v875 = vsel %vm873, %v827, 0
  %v878 = vsel %vm289, %v863, 0
  %v881 = vsel %vm289, %v864, 0
  %883 = vmatprep.subr.bf16.mxu0 %v856
  %884 = vmatpush1.bf16.msra.mxu0 %v855
  %885 = vmatprep.subr.bf16.mxu0 %v858
  %886 = vmatpush1.bf16.msra.mxu0 %v857
  %887 = vmatprep.subr.bf16.mxu0 %v860
  %888 = vmatpush1.bf16.msra.mxu0 %v859
  %889 = vmatprep.subr.bf16.mxu0 %v862
  %890 = vmatpush1.bf16.msra.mxu0 %v861
  %891 = vmatprep.subr.bf16.mxu0 %v881
  %892 = vmatpush1.bf16.msra.mxu0 %v878
  %893 = vmatprep.subr.bf16.mxu0 0
  %894 = vmatpush1.bf16.msra.mxu0 0
  %895 = vmatprep.subr.bf16.mxu0 0
  %896 = vmatpush1.bf16.msra.mxu0 0
  %897 = vmatprep.subr.bf16.mxu0 0
  %898 = vmatpush1.bf16.msra.mxu0 0
  %899 = vmatprep.subr.bf16.mxu0 0
  %900 = vmatpush1.bf16.msra.mxu0 0
  %901 = vmatprep.subr.bf16.mxu0 0
  %902 = vmatpush1.bf16.msra.mxu0 0
  %903 = vmatprep.subr.bf16.mxu0 0
  %904 = vmatpush1.bf16.msra.mxu0 0
  %905 = vmatprep.subr.bf16.mxu0 0
  %906 = vmatpush1.bf16.msra.mxu0 0
  %907 = vmatprep.subr.bf16.mxu0 0
  %908 = vmatpush1.bf16.msra.mxu0 0
  %909 = vmatprep.subr.bf16.mxu0 0
  %910 = vmatpush1.bf16.msra.mxu0 0
  %911 = vmatprep.subr.bf16.mxu0 0
  %912 = vmatpush1.bf16.msra.mxu0 0
  %913 = vmatprep.subr.bf16.mxu0 0
  %914 = vmatpush1.bf16.msra.mxu0 0
  %915 = vmatprep.mubr.bf16.mxu0 0
  %916 = vmatmul.mubr.bf16.gmra.mrb[0].mxu0 %v875
  %v917 = vpop.f32.mrb[0].mxu0
  %v918 = vadd.f32 0.0, %v917
  %v919 = vpop.f32.mrb[0].mxu0
  %v920 = vadd.f32 0.0, %v919
  %v921 = vpop.f32.mrb[0].mxu0
  %v922 = vpop.f32.mrb[0].mxu0
  %923 = vdwg.mxu0
  %v924 = vmax.f32 %v918, 0.0
  %v925 = vmax.f32 %v920, 0.0
  %v926 = vmax.f32 %v808, %v809
  %v927 = vmax.f32 %v809, %v810
  %v928 = vmax.f32 %v810, %v811
  %v929 = vmax.f32 %v811, %v812
  %v930 = vmax.f32 %v812, %v813
  %v931 = vmax.f32 %v813, %v814
  %v932 = vmax.f32 %v814, %v815
  %v933 = vmax.f32 %v815, %v816
  %v934 = vmax.f32 %v816, %v817
  %v935 = vmax.f32 %v817, %v818
  %v936 = vmax.f32 %v818, %v819
  %v937 = vmax.f32 %v819, %v820
  %v938 = vmax.f32 %v820, %v821
  %v939 = vmax.f32 %v926, %v928
  %v940 = vmax.f32 %v927, %v929
  %v941 = vmax.f32 %v928, %v930
  %v942 = vmax.f32 %v929, %v931
  %v943 = vmax.f32 %v930, %v932
  %v944 = vmax.f32 %v931, %v933
  %v945 = vmax.f32 %v932, %v934
  %v946 = vmax.f32 %v933, %v935
  %v947 = vmax.f32 %v934, %v936
  %v948 = vmax.f32 %v935, %v937
  %v949 = vmax.f32 %v936, %v938
  %v950 = vmax.f32 %v939, %v943
  %v951 = vmax.f32 %v940, %v944
  %v952 = vmax.f32 %v941, %v945
  %v953 = vmax.f32 %v942, %v946
  %v954 = vmax.f32 %v943, %v947
  %v955 = vmax.f32 %v944, %v948
  %v956 = vmax.f32 %v945, %v949
  %v957 = vpack.c.bf16 %v951, %v950
  %v958 = vpack.c.bf16 %v953, %v952
  %v959 = vpack.c.bf16 %v955, %v954
  %v960 = vpack.c.bf16 %v956, %v956
  %v970 = vunpack.c.l.b16 %v47
  %v971 = vunpack.c.h.b16 %v47
  %v972 = vunpack.c.l.b16 %v48
  %v973 = vunpack.c.h.b16 %v48
  %v974 = vunpack.c.l.b16 %v49
  %v975 = vunpack.c.h.b16 %v49
  %v976 = vunpack.c.l.b16 %v50
  %v977 = vunpack.c.h.b16 %v50
  %v978 = vunpack.c.l.b16 %v51
  %v979 = vunpack.c.h.b16 %v51
  %v980 = vunpack.c.l.b16 %v52
  %v981 = vunpack.c.h.b16 %v52
  %v982 = vunpack.c.l.b16 %v53
  %v983 = vunpack.c.h.b16 %v53
  %v984 = vunpack.c.l.b16 %v54
  %v985 = vunpack.c.h.b16 %v54
  %v986 = vunpack.c.l.b16 %v55
  %v987 = vunpack.c.h.b16 %v55
  %v988 = vpack.c.b16 %v972, %v970
  %v989 = vpack.c.b16 %v973, %v971
  %v990 = vpack.c.b16 %v976, %v974
  %v991 = vpack.c.b16 %v977, %v975
  %v992 = vpack.c.b16 %v980, %v978
  %v993 = vpack.c.b16 %v981, %v979
  %v994 = vpack.c.b16 %v984, %v982
  %v995 = vpack.c.b16 %v985, %v983
  %v996 = vpack.c.b16 %v986, %v986
  %v997 = vpack.c.b16 %v987, %v987
  %v1007 = vsel %vm873, %v957, 0
  %v1010 = vsel %vm873, %v958, 0
  %v1013 = vsel %vm873, %v959, 0
  %v1016 = vsel %vm873, %v960, 0
  %v1019 = vsel %vm289, %v996, 0
  %v1022 = vsel %vm289, %v997, 0
  %1024 = vmatprep.subr.bf16.mxu0 %v989
  %1025 = vmatpush1.bf16.msra.mxu0 %v988
  %1026 = vmatprep.subr.bf16.mxu0 %v991
  %1027 = vmatpush1.bf16.msra.mxu0 %v990
  %1028 = vmatprep.subr.bf16.mxu0 %v993
  %1029 = vmatpush1.bf16.msra.mxu0 %v992
  %1030 = vmatprep.subr.bf16.mxu0 %v995
  %1031 = vmatpush1.bf16.msra.mxu0 %v994
  %1032 = vmatprep.subr.bf16.mxu0 %v1022
  %1033 = vmatpush1.bf16.msra.mxu0 %v1019
  %1034 = vmatprep.subr.bf16.mxu0 0
  %1035 = vmatpush1.bf16.msra.mxu0 0
  %1036 = vmatprep.subr.bf16.mxu0 0
  %1037 = vmatpush1.bf16.msra.mxu0 0
  %1038 = vmatprep.subr.bf16.mxu0 0
  %1039 = vmatpush1.bf16.msra.mxu0 0
  %1040 = vmatprep.subr.bf16.mxu0 0
  %1041 = vmatpush1.bf16.msra.mxu0 0
  %1042 = vmatprep.subr.bf16.mxu0 0
  %1043 = vmatpush1.bf16.msra.mxu0 0
  %1044 = vmatprep.subr.bf16.mxu0 0
  %1045 = vmatpush1.bf16.msra.mxu0 0
  %1046 = vmatprep.subr.bf16.mxu0 0
  %1047 = vmatpush1.bf16.msra.mxu0 0
  %1048 = vmatprep.subr.bf16.mxu0 0
  %1049 = vmatpush1.bf16.msra.mxu0 0
  %1050 = vmatprep.subr.bf16.mxu0 0
  %1051 = vmatpush1.bf16.msra.mxu0 0
  %1052 = vmatprep.subr.bf16.mxu0 0
  %1053 = vmatpush1.bf16.msra.mxu0 0
  %1054 = vmatprep.subr.bf16.mxu0 0
  %1055 = vmatpush1.bf16.msra.mxu0 0
  %1056 = vmatprep.mubr.bf16.mxu0 0
  %1057 = vmatmul.mubr.bf16.gmra.mrb[0].mxu0 %v1007
  %v1058 = vpop.f32.mrb[0].mxu0
  %v1059 = vadd.f32 0.0, %v1058
  %v1060 = vpop.f32.mrb[0].mxu0
  %v1061 = vadd.f32 0.0, %v1060
  %v1062 = vpop.f32.mrb[0].mxu0
  %v1063 = vadd.f32 0.0, %v1062
  %v1064 = vpop.f32.mrb[0].mxu0
  %v1065 = vadd.f32 0.0, %v1064
  %1066 = vmatprep.mubr.bf16.mxu0 0
  %1067 = vmatmul.mubr.bf16.gmra.mrb[0].mxu0 %v1010
  %v1068 = vpop.f32.mrb[0].mxu0
  %v1069 = vadd.f32 0.0, %v1068
  %v1070 = vpop.f32.mrb[0].mxu0
  %v1071 = vadd.f32 0.0, %v1070
  %v1072 = vpop.f32.mrb[0].mxu0
  %v1073 = vadd.f32 0.0, %v1072
  %v1074 = vpop.f32.mrb[0].mxu0
  %v1075 = vadd.f32 0.0, %v1074
  %1076 = vmatprep.mubr.bf16.mxu0 0
  %1077 = vmatmul.mubr.bf16.gmra.mrb[0].mxu0 %v1013
  %v1078 = vpop.f32.mrb[0].mxu0
  %v1079 = vadd.f32 0.0, %v1078
  %v1080 = vpop.f32.mrb[0].mxu0
  %v1081 = vadd.f32 0.0, %v1080
  %v1082 = vpop.f32.mrb[0].mxu0
  %v1083 = vadd.f32 0.0, %v1082
  %v1084 = vpop.f32.mrb[0].mxu0
  %v1085 = vadd.f32 0.0, %v1084
  %1086 = vmatprep.mubr.bf16.mxu0 0
  %1087 = vmatmul.mubr.bf16.gmra.mrb[0].mxu0 %v1016
  %v1088 = vpop.f32.mrb[0].mxu0
  %v1089 = vadd.f32 0.0, %v1088
  %v1090 = vpop.f32.mrb[0].mxu0
  %v1091 = vadd.f32 0.0, %v1090
  %v1092 = vpop.f32.mrb[0].mxu0
  %v1093 = vpop.f32.mrb[0].mxu0
  %1094 = vdwg.mxu0
  %v1095 = vmax.f32 %v1059, 0.0
  %v1096 = vmax.f32 %v1061, 0.0
  %v1097 = vmax.f32 %v1063, 0.0
  %v1098 = vmax.f32 %v1065, 0.0
  %v1099 = vmax.f32 %v1069, 0.0
  %v1100 = vmax.f32 %v1071, 0.0
  %v1101 = vmax.f32 %v1073, 0.0
  %v1102 = vmax.f32 %v1075, 0.0
  %v1103 = vmax.f32 %v1079, 0.0
  %v1104 = vmax.f32 %v1081, 0.0
  %v1105 = vmax.f32 %v1083, 0.0
  %v1106 = vmax.f32 %v1085, 0.0
  %v1107 = vmax.f32 %v1089, 0.0
  %v1108 = vmax.f32 %v1091, 0.0
  %v1109 = vmul.f32 %v1095, %v924
  %v1110 = vmul.f32 %v1096, %v925
  %v1111 = vmul.f32 %v1097, %v924
  %v1112 = vmul.f32 %v1098, %v925
  %v1113 = vmul.f32 %v1099, %v924
  %v1114 = vmul.f32 %v1100, %v925
  %v1115 = vmul.f32 %v1101, %v924
  %v1116 = vmul.f32 %v1102, %v925
  %v1117 = vmul.f32 %v1103, %v924
  %v1118 = vmul.f32 %v1104, %v925
  %v1119 = vmul.f32 %v1105, %v924
  %v1120 = vmul.f32 %v1106, %v925
  %v1121 = vmul.f32 %v1107, %v924
  %v1122 = vmul.f32 %v1108, %v925
  %v1123 = vmul.f32 %v1109, %v63
  %v1124 = vmul.f32 %v1110, %v64
  %v1125 = vmul.f32 %v1111, %v65
  %v1126 = vmul.f32 %v1112, %v66
  %v1127 = vmul.f32 %v1113, %v67
  %v1128 = vmul.f32 %v1114, %v68
  %v1129 = vmul.f32 %v1115, %v69
  %v1130 = vmul.f32 %v1116, %v70
  %v1131 = vmul.f32 %v1117, %v71
  %v1132 = vmul.f32 %v1118, %v72
  %v1133 = vmul.f32 %v1119, %v73
  %v1134 = vmul.f32 %v1120, %v74
  %v1135 = vmul.f32 %v1121, %v75
  %v1136 = vmul.f32 %v1122, %v76
  %v1137 = vpack.c.bf16 %v1125, %v1123
  %v1138 = vpack.c.bf16 %v1126, %v1124
  %v1139 = vpack.c.bf16 %v1129, %v1127
  %v1140 = vpack.c.bf16 %v1130, %v1128
  %v1141 = vpack.c.bf16 %v1133, %v1131
  %v1142 = vpack.c.bf16 %v1134, %v1132
  %v1143 = vpack.c.bf16 %v1135, %v1135
  %v1144 = vpack.c.bf16 %v1136, %v1136
  %v1177 = vunpack.c.l.b16 %v109
  %v1178 = vunpack.c.l.b16 %v110
  %v1179 = vunpack.c.l.b16 %v111
  %v1180 = vunpack.c.l.b16 %v112
  %v1181 = vunpack.c.l.b16 %v113
  %v1182 = vunpack.c.l.b16 %v114
  %v1183 = vunpack.c.l.b16 %v115
  %v1184 = vunpack.c.l.b16 %v116
  %v1185 = vunpack.c.l.b16 %v117
  %v1186 = vunpack.c.l.b16 %v118
  %v1187 = vunpack.c.l.b16 %v119
  %v1188 = vunpack.c.l.b16 %v120
  %v1189 = vunpack.c.l.b16 %v121
  %v1190 = vunpack.c.l.b16 %v122
  %v1191 = vunpack.c.l.b16 %v123
  %v1192 = vunpack.c.l.b16 %v124
  %v1193 = vunpack.c.l.b16 %v125
  %v1194 = vunpack.c.l.b16 %v126
  %v1195 = vunpack.c.l.b16 %v127
  %v1196 = vunpack.c.l.b16 %v128
  %v1197 = vunpack.c.l.b16 %v129
  %v1198 = vunpack.c.l.b16 %v130
  %v1199 = vunpack.c.l.b16 %v131
  %v1200 = vunpack.c.l.b16 %v132
  %v1201 = vunpack.c.l.b16 %v133
  %v1202 = vunpack.c.l.b16 %v134
  %v1203 = vunpack.c.l.b16 %v135
  %v1204 = vunpack.c.l.b16 %v136
  %v1205 = vunpack.c.l.b16 %v137
  %v1206 = vunpack.c.l.b16 %v138
  %v1207 = vunpack.c.l.b16 %v139
  %v1208 = vunpack.c.l.b16 %v140
  %v1209 = vpack.c.b16 %v1178, %v1177
  %v1210 = vpack.c.b16 %v1180, %v1179
  %v1211 = vpack.c.b16 %v1182, %v1181
  %v1212 = vpack.c.b16 %v1184, %v1183
  %v1213 = vpack.c.b16 %v1186, %v1185
  %v1214 = vpack.c.b16 %v1188, %v1187
  %v1215 = vpack.c.b16 %v1190, %v1189
  %v1216 = vpack.c.b16 %v1192, %v1191
  %v1217 = vpack.c.b16 %v1194, %v1193
  %v1218 = vpack.c.b16 %v1196, %v1195
  %v1219 = vpack.c.b16 %v1198, %v1197
  %v1220 = vpack.c.b16 %v1200, %v1199
  %v1221 = vpack.c.b16 %v1202, %v1201
  %v1222 = vpack.c.b16 %v1204, %v1203
  %v1223 = vpack.c.b16 %v1206, %v1205
  %v1224 = vpack.c.b16 %v1208, %v1207
  %1241 = vmatprep.subr.bf16.mxu0 0
  %1242 = vmatpush1.bf16.msra.mxu0 %v1209
  %1243 = vmatprep.subr.bf16.mxu0 0
  %1244 = vmatpush1.bf16.msra.mxu0 %v1210
  %1245 = vmatprep.subr.bf16.mxu0 0
  %1246 = vmatpush1.bf16.msra.mxu0 %v1211
  %1247 = vmatprep.subr.bf16.mxu0 0
  %1248 = vmatpush1.bf16.msra.mxu0 %v1212
  %1249 = vmatprep.subr.bf16.mxu0 0
  %1250 = vmatpush1.bf16.msra.mxu0 %v1213
  %1251 = vmatprep.subr.bf16.mxu0 0
  %1252 = vmatpush1.bf16.msra.mxu0 %v1214
  %1253 = vmatprep.subr.bf16.mxu0 0
  %1254 = vmatpush1.bf16.msra.mxu0 %v1215
  %1255 = vmatprep.subr.bf16.mxu0 0
  %1256 = vmatpush1.bf16.msra.mxu0 %v1216
  %1257 = vmatprep.subr.bf16.mxu0 0
  %1258 = vmatpush1.bf16.msra.mxu0 %v1217
  %1259 = vmatprep.subr.bf16.mxu0 0
  %1260 = vmatpush1.bf16.msra.mxu0 %v1218
  %1261 = vmatprep.subr.bf16.mxu0 0
  %1262 = vmatpush1.bf16.msra.mxu0 %v1219
  %1263 = vmatprep.subr.bf16.mxu0 0
  %1264 = vmatpush1.bf16.msra.mxu0 %v1220
  %1265 = vmatprep.subr.bf16.mxu0 0
  %1266 = vmatpush1.bf16.msra.mxu0 %v1221
  %1267 = vmatprep.subr.bf16.mxu0 0
  %1268 = vmatpush1.bf16.msra.mxu0 %v1222
  %1269 = vmatprep.subr.bf16.mxu0 0
  %1270 = vmatpush1.bf16.msra.mxu0 %v1223
  %1271 = vmatprep.subr.bf16.mxu0 0
  %1272 = vmatpush1.bf16.msra.mxu0 %v1224
  %1273 = vmatprep.mubr.bf16.mxu0 %v1138
  %1274 = vmatmul.mubr.bf16.gmra.mrb[0].mxu0 %v1137
  %v1275 = vpop.f32.mrb[0].mxu0
  %v1276 = vadd.f32 0.0, %v1275
  %v1277 = vpop.f32.mrb[0].mxu0
  %v1278 = vpop.f32.mrb[0].mxu0
  %v1279 = vadd.f32 0.0, %v1278
  %v1280 = vpop.f32.mrb[0].mxu0
  %1281 = vmatprep.mubr.bf16.mxu0 %v1140
  %1282 = vmatmul.mubr.bf16.gmra.mrb[0].mxu0 %v1139
  %v1283 = vpop.f32.mrb[0].mxu0
  %v1284 = vadd.f32 0.0, %v1283
  %v1285 = vpop.f32.mrb[0].mxu0
  %v1286 = vpop.f32.mrb[0].mxu0
  %v1287 = vadd.f32 0.0, %v1286
  %v1288 = vpop.f32.mrb[0].mxu0
  %1289 = vmatprep.mubr.bf16.mxu0 %v1142
  %1290 = vmatmul.mubr.bf16.gmra.mrb[0].mxu0 %v1141
  %v1291 = vpop.f32.mrb[0].mxu0
  %v1292 = vadd.f32 0.0, %v1291
  %v1293 = vpop.f32.mrb[0].mxu0
  %v1294 = vpop.f32.mrb[0].mxu0
  %v1295 = vadd.f32 0.0, %v1294
  %v1296 = vpop.f32.mrb[0].mxu0
  %1297 = vmatprep.mubr.bf16.mxu0 %v1144
  %1298 = vmatmul.mubr.bf16.gmra.mrb[0].mxu0 %v1143
  %v1299 = vpop.f32.mrb[0].mxu0
  %v1300 = vadd.f32 0.0, %v1299
  %v1301 = vpop.f32.mrb[0].mxu0
  %v1302 = vpop.f32.mrb[0].mxu0
  %v1303 = vpop.f32.mrb[0].mxu0
  %1304 = vdwg.mxu0
  %v1305 = vpack.c.bf16 %v1279, %v1276
  %v1306 = vpack.c.bf16 %v1287, %v1284
  %v1307 = vpack.c.bf16 %v1295, %v1292
  %v1308 = vpack.c.bf16 %v1300, %v1300
  %v1309 = vld [vmem:[%s4 + $0x2] sm:$0x1]
  %v1310 = vlaneseq
  %v1311 = vshrl.u32 %v1310, 7
  %v1312 = vsub.s32 0, %v1311
  %v1313 = vrot.slane %v1309, %v1312
  %vm1314 = vcmask 457728
  %v1316 = vsel %vm1314, %v154, 0
  %v1319 = vsel %vm289, %v1308, 0
  %1321 = vmatprep.subr.bf16.mxu0 0
  %1322 = vmatpush1.bf16.msra.mxu0 %v1305
  %1323 = vmatprep.subr.bf16.mxu0 0
  %1324 = vmatpush1.bf16.msra.mxu0 %v1306
  %1325 = vmatprep.subr.bf16.mxu0 0
  %1326 = vmatpush1.bf16.msra.mxu0 %v1307
  %1327 = vmatprep.subr.bf16.mxu0 0
  %1328 = vmatpush1.bf16.msra.mxu0 %v1319
  %1329 = vmatprep.subr.bf16.mxu0 0
  %1330 = vmatpush1.bf16.msra.mxu0 0
  %1331 = vmatprep.subr.bf16.mxu0 0
  %1332 = vmatpush1.bf16.msra.mxu0 0
  %1333 = vmatprep.subr.bf16.mxu0 0
  %1334 = vmatpush1.bf16.msra.mxu0 0
  %1335 = vmatprep.subr.bf16.mxu0 0
  %1336 = vmatpush1.bf16.msra.mxu0 0
  %1337 = vmatprep.subr.bf16.mxu0 0
  %1338 = vmatpush1.bf16.msra.mxu0 0
  %1339 = vmatprep.subr.bf16.mxu0 0
  %1340 = vmatpush1.bf16.msra.mxu0 0
  %1341 = vmatprep.subr.bf16.mxu0 0
  %1342 = vmatpush1.bf16.msra.mxu0 0
  %1343 = vmatprep.subr.bf16.mxu0 0
  %1344 = vmatpush1.bf16.msra.mxu0 0
  %1345 = vmatprep.subr.bf16.mxu0 0
  %1346 = vmatpush1.bf16.msra.mxu0 0
  %1347 = vmatprep.subr.bf16.mxu0 0
  %1348 = vmatpush1.bf16.msra.mxu0 0
  %1349 = vmatprep.subr.bf16.mxu0 0
  %1350 = vmatpush1.bf16.msra.mxu0 0
  %1351 = vmatprep.subr.bf16.mxu0 0
  %1352 = vmatpush1.bf16.msra.mxu0 0
  %1353 = vmatprep.mubr.bf16.mxu0 0
  %1354 = vmatmul.mubr.bf16.gmra.mrb[0].mxu0 %v1316
  %v1355 = vpop.f32.mrb[0].mxu0
  %v1356 = vadd.f32 %v1313, %v1355
  %v1357 = vpop.f32.mrb[0].mxu0
  %v1358 = vpop.f32.mrb[0].mxu0
  %v1359 = vpop.f32.mrb[0].mxu0
  %1360 = vdwg.mxu0
  %v1361 = vmax.f32 %v1356, 0.0
  %v1362 = vpack.c.bf16 %v1361, %v1361
  %v1363 = vld [vmem:[%s4 + $0x3] sm:$0x1]
  %v1364 = vlaneseq
  %v1365 = vshrl.u32 %v1364, 7
  %v1366 = vsub.s32 0, %v1365
  %v1367 = vrot.slane %v1363, %v1366
  %v1372 = vunpack.c.l.b16 %v159
  %v1373 = vunpack.c.l.b16 %v160
  %v1374 = vunpack.c.l.b16 %v161
  %v1375 = vunpack.c.l.b16 %v162
  %v1376 = vpack.c.b16 %v1373, %v1372
  %v1377 = vpack.c.b16 %v1375, %v1374
  %v1381 = vsel %vm501, %v1362, 0
  %1383 = vmatprep.subr.bf16.mxu0 0
  %1384 = vmatpush1.bf16.msra.mxu0 %v1376
  %1385 = vmatprep.subr.bf16.mxu0 0
  %1386 = vmatpush1.bf16.msra.mxu0 %v1377
  %1387 = vmatprep.subr.bf16.mxu0 0
  %1388 = vmatpush1.bf16.msra.mxu0 0
  %1389 = vmatprep.subr.bf16.mxu0 0
  %1390 = vmatpush1.bf16.msra.mxu0 0
  %1391 = vmatprep.subr.bf16.mxu0 0
  %1392 = vmatpush1.bf16.msra.mxu0 0
  %1393 = vmatprep.subr.bf16.mxu0 0
  %1394 = vmatpush1.bf16.msra.mxu0 0
  %1395 = vmatprep.subr.bf16.mxu0 0
  %1396 = vmatpush1.bf16.msra.mxu0 0
  %1397 = vmatprep.subr.bf16.mxu0 0
  %1398 = vmatpush1.bf16.msra.mxu0 0
  %1399 = vmatprep.subr.bf16.mxu0 0
  %1400 = vmatpush1.bf16.msra.mxu0 0
  %1401 = vmatprep.subr.bf16.mxu0 0
  %1402 = vmatpush1.bf16.msra.mxu0 0
  %1403 = vmatprep.subr.bf16.mxu0 0
  %1404 = vmatpush1.bf16.msra.mxu0 0
  %1405 = vmatprep.subr.bf16.mxu0 0
  %1406 = vmatpush1.bf16.msra.mxu0 0
  %1407 = vmatprep.subr.bf16.mxu0 0
  %1408 = vmatpush1.bf16.msra.mxu0 0
  %1409 = vmatprep.subr.bf16.mxu0 0
  %1410 = vmatpush1.bf16.msra.mxu0 0
  %1411 = vmatprep.subr.bf16.mxu0 0
  %1412 = vmatpush1.bf16.msra.mxu0 0
  %1413 = vmatprep.subr.bf16.mxu0 0
  %1414 = vmatpush1.bf16.msra.mxu0 0
  %1415 = vmatprep.mubr.bf16.mxu0 0
  %1416 = vmatmul.mubr.bf16.gmra.mrb[0].mxu0 %v1381
  %v1417 = vpop.f32.mrb[0].mxu0
  %v1418 = vadd.f32 %v1367, %v1417
  %v1419 = vpop.f32.mrb[0].mxu0
  %v1420 = vpop.f32.mrb[0].mxu0
  %v1421 = vpop.f32.mrb[0].mxu0
  %1422 = vdwg.mxu0
  %v1423 = vmax.f32 %v1418, 0.0
  %v1424 = vadd.f32 %v545, %v1423
  %v1425 = vpack.c.bf16 %v1424, %v1424
  %v1426 = vld [vmem:[%s4 + $0x4] sm:$0x1]
  %v1427 = vlaneseq
  %v1428 = vshrl.u32 %v1427, 7
  %v1429 = vsub.s32 0, %v1428
  %v1430 = vrot.slane %v1426, %v1429
  %v1435 = vunpack.c.l.b16 %v163
  %v1436 = vunpack.c.l.b16 %v164
  %v1437 = vunpack.c.l.b16 %v165
  %v1438 = vunpack.c.l.b16 %v166
  %v1439 = vpack.c.b16 %v1436, %v1435
  %v1440 = vpack.c.b16 %v1438, %v1437
  %v1444 = vsel %vm501, %v1425, 0
  %1446 = vmatprep.subr.bf16.mxu0 0
  %1447 = vmatpush1.bf16.msra.mxu0 %v1439
  %1448 = vmatprep.subr.bf16.mxu0 0
  %1449 = vmatpush1.bf16.msra.mxu0 %v1440
  %1450 = vmatprep.subr.bf16.mxu0 0
  %1451 = vmatpush1.bf16.msra.mxu0 0
  %1452 = vmatprep.subr.bf16.mxu0 0
  %1453 = vmatpush1.bf16.msra.mxu0 0
  %1454 = vmatprep.subr.bf16.mxu0 0
  %1455 = vmatpush1.bf16.msra.mxu0 0
  %1456 = vmatprep.subr.bf16.mxu0 0
  %1457 = vmatpush1.bf16.msra.mxu0 0
  %1458 = vmatprep.subr.bf16.mxu0 0
  %1459 = vmatpush1.bf16.msra.mxu0 0
  %1460 = vmatprep.subr.bf16.mxu0 0
  %1461 = vmatpush1.bf16.msra.mxu0 0
  %1462 = vmatprep.subr.bf16.mxu0 0
  %1463 = vmatpush1.bf16.msra.mxu0 0
  %1464 = vmatprep.subr.bf16.mxu0 0
  %1465 = vmatpush1.bf16.msra.mxu0 0
  %1466 = vmatprep.subr.bf16.mxu0 0
  %1467 = vmatpush1.bf16.msra.mxu0 0
  %1468 = vmatprep.subr.bf16.mxu0 0
  %1469 = vmatpush1.bf16.msra.mxu0 0
  %1470 = vmatprep.subr.bf16.mxu0 0
  %1471 = vmatpush1.bf16.msra.mxu0 0
  %1472 = vmatprep.subr.bf16.mxu0 0
  %1473 = vmatpush1.bf16.msra.mxu0 0
  %1474 = vmatprep.subr.bf16.mxu0 0
  %1475 = vmatpush1.bf16.msra.mxu0 0
  %1476 = vmatprep.subr.bf16.mxu0 0
  %1477 = vmatpush1.bf16.msra.mxu0 0
  %1478 = vmatprep.mubr.bf16.mxu0 0
  %1479 = vmatmul.mubr.bf16.gmra.mrb[0].mxu0 %v1444
  %v1480 = vpop.f32.mrb[0].mxu0
  %v1481 = vadd.f32 %v1430, %v1480
  %v1482 = vpop.f32.mrb[0].mxu0
  %v1483 = vpop.f32.mrb[0].mxu0
  %v1484 = vpop.f32.mrb[0].mxu0
  %1485 = vdwg.mxu0
  %v1486 = vmax.f32 %v1481, 0.0
  %v1487 = vpack.c.bf16 %v1486, %v1486
  %v1488 = vld [vmem:[%s4 + $0x5] sm:$0x1]
  %v1489 = vlaneseq
  %v1490 = vshrl.u32 %v1489, 7
  %v1491 = vsub.s32 0, %v1490
  %v1492 = vrot.slane %v1488, %v1491
  %v1497 = vunpack.c.l.b16 %v167
  %v1498 = vunpack.c.l.b16 %v168
  %v1499 = vunpack.c.l.b16 %v169
  %v1500 = vunpack.c.l.b16 %v170
  %v1501 = vpack.c.b16 %v1498, %v1497
  %v1502 = vpack.c.b16 %v1500, %v1499
  %v1506 = vsel %vm501, %v1487, 0
  %1508 = vmatprep.subr.bf16.mxu0 0
  %1509 = vmatpush1.bf16.msra.mxu0 %v1501
  %1510 = vmatprep.subr.bf16.mxu0 0
  %1511 = vmatpush1.bf16.msra.mxu0 %v1502
  %1512 = vmatprep.subr.bf16.mxu0 0
  %1513 = vmatpush1.bf16.msra.mxu0 0
  %1514 = vmatprep.subr.bf16.mxu0 0
  %1515 = vmatpush1.bf16.msra.mxu0 0
  %1516 = vmatprep.subr.bf16.mxu0 0
  %1517 = vmatpush1.bf16.msra.mxu0 0
  %1518 = vmatprep.subr.bf16.mxu0 0
  %1519 = vmatpush1.bf16.msra.mxu0 0
  %1520 = vmatprep.subr.bf16.mxu0 0
  %1521 = vmatpush1.bf16.msra.mxu0 0
  %1522 = vmatprep.subr.bf16.mxu0 0
  %1523 = vmatpush1.bf16.msra.mxu0 0
  %1524 = vmatprep.subr.bf16.mxu0 0
  %1525 = vmatpush1.bf16.msra.mxu0 0
  %1526 = vmatprep.subr.bf16.mxu0 0
  %1527 = vmatpush1.bf16.msra.mxu0 0
  %1528 = vmatprep.subr.bf16.mxu0 0
  %1529 = vmatpush1.bf16.msra.mxu0 0
  %1530 = vmatprep.subr.bf16.mxu0 0
  %1531 = vmatpush1.bf16.msra.mxu0 0
  %1532 = vmatprep.subr.bf16.mxu0 0
  %1533 = vmatpush1.bf16.msra.mxu0 0
  %1534 = vmatprep.subr.bf16.mxu0 0
  %1535 = vmatpush1.bf16.msra.mxu0 0
  %1536 = vmatprep.subr.bf16.mxu0 0
  %1537 = vmatpush1.bf16.msra.mxu0 0
  %1538 = vmatprep.subr.bf16.mxu0 0
  %1539 = vmatpush1.bf16.msra.mxu0 0
  %1540 = vmatprep.mubr.bf16.mxu0 0
  %1541 = vmatmul.mubr.bf16.gmra.mrb[0].mxu0 %v1506
  %v1542 = vpop.f32.mrb[0].mxu0
  %v1543 = vadd.f32 %v1492, %v1542
  %v1544 = vpop.f32.mrb[0].mxu0
  %v1545 = vpop.f32.mrb[0].mxu0
  %v1546 = vpop.f32.mrb[0].mxu0
  %1547 = vdwg.mxu0
  %v1548 = vmax.f32 %v1543, 0.0
  %v1549 = vpack.c.bf16 %v1548, %v1548
  %v1550 = vld [vmem:[%s4 + $0x6] sm:$0x1]
  %v1551 = vlaneseq
  %v1552 = vshrl.u32 %v1551, 7
  %v1553 = vsub.s32 0, %v1552
  %v1554 = vrot.slane %v1550, %v1553
  %v1559 = vunpack.c.l.b16 %v171
  %v1560 = vunpack.c.l.b16 %v172
  %v1561 = vunpack.c.l.b16 %v173
  %v1562 = vunpack.c.l.b16 %v174
  %v1563 = vpack.c.b16 %v1560, %v1559
  %v1564 = vpack.c.b16 %v1562, %v1561
  %v1568 = vsel %vm501, %v1549, 0
  %1570 = vmatprep.subr.bf16.mxu0 0
  %1571 = vmatpush1.bf16.msra.mxu0 %v1563
  %1572 = vmatprep.subr.bf16.mxu0 0
  %1573 = vmatpush1.bf16.msra.mxu0 %v1564
  %1574 = vmatprep.subr.bf16.mxu0 0
  %1575 = vmatpush1.bf16.msra.mxu0 0
  %1576 = vmatprep.subr.bf16.mxu0 0
  %1577 = vmatpush1.bf16.msra.mxu0 0
  %1578 = vmatprep.subr.bf16.mxu0 0
  %1579 = vmatpush1.bf16.msra.mxu0 0
  %1580 = vmatprep.subr.bf16.mxu0 0
  %1581 = vmatpush1.bf16.msra.mxu0 0
  %1582 = vmatprep.subr.bf16.mxu0 0
  %1583 = vmatpush1.bf16.msra.mxu0 0
  %1584 = vmatprep.subr.bf16.mxu0 0
  %1585 = vmatpush1.bf16.msra.mxu0 0
  %1586 = vmatprep.subr.bf16.mxu0 0
  %1587 = vmatpush1.bf16.msra.mxu0 0
  %1588 = vmatprep.subr.bf16.mxu0 0
  %1589 = vmatpush1.bf16.msra.mxu0 0
  %1590 = vmatprep.subr.bf16.mxu0 0
  %1591 = vmatpush1.bf16.msra.mxu0 0
  %1592 = vmatprep.subr.bf16.mxu0 0
  %1593 = vmatpush1.bf16.msra.mxu0 0
  %1594 = vmatprep.subr.bf16.mxu0 0
  %1595 = vmatpush1.bf16.msra.mxu0 0
  %1596 = vmatprep.subr.bf16.mxu0 0
  %1597 = vmatpush1.bf16.msra.mxu0 0
  %1598 = vmatprep.subr.bf16.mxu0 0
  %1599 = vmatpush1.bf16.msra.mxu0 0
  %1600 = vmatprep.subr.bf16.mxu0 0
  %1601 = vmatpush1.bf16.msra.mxu0 0
  %1602 = vmatprep.mubr.bf16.mxu0 0
  %1603 = vmatmul.mubr.bf16.gmra.mrb[0].mxu0 %v1568
  %v1604 = vpop.f32.mrb[0].mxu0
  %v1605 = vadd.f32 %v1554, %v1604
  %v1606 = vpop.f32.mrb[0].mxu0
  %v1607 = vpop.f32.mrb[0].mxu0
  %v1608 = vpop.f32.mrb[0].mxu0
  %1609 = vdwg.mxu0
  %v1610 = vmax.f32 %v1605, 0.0
  %v1611 = vmul.f32 %v1610, 0.1
  %vm1612 = vcmask 1024
  %1613 = vst.msk [vmem:[%s5] sm:$0x3] %vm1612, %v1611
  // Predicated region
  $region22: #{duet_forward_pallas.1} parent=0 // pred_check
    _
  $region23: #{duet_forward_pallas.1} parent=0 // pred_check_branch
    %1615 = sbr.rel (0) target = $region25
  $region24: #{duet_forward_pallas.1} parent=0 // pred_region
    _
  $region25: #{duet_forward_pallas.1} parent=0 // pred_fallthru
    _
  // Predicated region
  $region26: #{duet_forward_pallas.1} parent=0 // pred_check
    _
  $region27: #{duet_forward_pallas.1} parent=0 // pred_check_branch
    %1617 = sbr.rel (0) target = $region29
  $region28: #{duet_forward_pallas.1} parent=0 // pred_region
    _
  $region29: #{duet_forward_pallas.1} parent=0 // pred_fallthru
    _

</llo_original>
